<compile_context>
chip_gen: v6e
topology: v6e:2x2x1
jax: 0.10.0
libtpu: 0.0.40
codegen_flags: <defaults>
</compile_context>

<pallas_src>
import functools

import jax
import jax.numpy as jnp
from jax import lax
from jax.experimental import pallas as pl
from jax.experimental.pallas import tpu as pltpu

HIDDEN = 64
LN_EPS = 1e-5
_VMEM_LIMIT = 32 * 1024 * 1024      # safe on v5e/v6e (128 MiB) and v7x (64 MiB)
_TILE_BUDGET = 16 * 1024 * 1024     # budget used to size the column tile


def _velocity_kernel(scal_ref, u_ref, d_ref, w1_ref, chan_ref, red_ref, o_ref):
    """One column tile; columns are independent (b, s) rows on the lane axis.

    scal_ref : SMEM (5,) f32   [b12, b22, w3_up, w3_dn, b3]
    u_ref    : (T, cols)       upstream rows (raw; scaler folded into w1)
    d_ref    : (T, cols)       downstream rows
    w1_ref   : (2, H, T)       folded first-layer weights (scaler absorbed)
    chan_ref : (2, H, 3) f32   per-channel [folded bias, LN gamma, LN beta]
    red_ref  : (2, 8, H) f32   MXU reduction matrix: row0 = 1/H, row1 = w2
    o_ref    : (1, cols) f32   combined output row
    """

    def branch(b, x_raw, b2):
        x = x_raw.astype(w1_ref.dtype)                       # cast fused in-kernel
        h = jnp.dot(w1_ref[b], x, preferred_element_type=jnp.float32)   # MXU
        ch = chan_ref[b]                                     # (H, 3)
        h = h + ch[:, 0:1]                                   # folded bias
        red = red_ref[b]                                     # (8, H)
        # LayerNorm stats on the (idle) MXU instead of sublane reductions.
        mu = jnp.dot(red, h, preferred_element_type=jnp.float32)[0:1]           # (1, cols)
        dlt = h - mu
        var = jnp.dot(red, dlt * dlt, preferred_element_type=jnp.float32)[0:1]  # two-pass var
        rstd = lax.rsqrt(var + LN_EPS)
        hn = jnp.maximum(dlt * ch[:, 1:2] * rstd + ch[:, 2:3], 0.0)   # LN affine + ReLU (VPU)
        # Second linear (H -> 1) is row 1 of the same reduction matrix (MXU).
        y = jnp.dot(red, hn, preferred_element_type=jnp.float32)[1:2] + b2
        return jax.nn.sigmoid(y)                              # EUP

    y_up = branch(0, u_ref[...], scal_ref[0])
    y_dn = branch(1, d_ref[...], scal_ref[1])
    # linear3 on [y_up, y_dn] == w3[0]*y_up + w3[1]*y_dn + b3
    o_ref[...] = y_up * scal_ref[2] + y_dn * scal_ref[3] + scal_ref[4]


def _fold_and_pack(p, T, matmul_dtype):
    """Fold the standardizer into the first layer and pack the small params."""
    inv_sc = p["inv_sc"].reshape(1, T).astype(jnp.float32)
    shift = (p["mu"].reshape(1, T) * inv_sc).reshape(T, 1)

    def fold(w1, b1):
        w1t = w1.T.astype(jnp.float32)                        # (H, T)
        return w1t * inv_sc, b1.reshape(HIDDEN, 1) - w1t @ shift

    wu, bu = fold(p["w11"], p["b11"])
    wd, bd = fold(p["w21"], p["b21"])
    w1 = jnp.stack([wu, wd]).astype(matmul_dtype)             # (2, H, T)

    def chan_cols(b_eff, g, be):
        return jnp.concatenate(
            [b_eff, g.reshape(HIDDEN, 1), be.reshape(HIDDEN, 1)], axis=1)

    chan = jnp.stack([chan_cols(bu, p["g11"], p["be11"]),
                      chan_cols(bd, p["g21"], p["be21"])]).astype(jnp.float32)  # (2, H, 3)

    def red_mat(w2):
        r = jnp.zeros((8, HIDDEN), jnp.float32)
        r = r.at[0, :].set(1.0 / HIDDEN)                      # mean row
        r = r.at[1, :].set(w2.reshape(HIDDEN))                # 2nd-linear row
        return r

    red = jnp.stack([red_mat(p["w12"]), red_mat(p["w22"])])   # (2, 8, H)

    scal = jnp.array([p["b12"][0, 0], p["b22"][0, 0],
                      p["w3"][0, 0], p["w3"][0, 1], p["b3"][0, 0]], jnp.float32)
    return w1, chan, red, scal


def _pick_cols(T, itemsize, tm):
    """Column-tile size from a VMEM budget (f32 intermediates dominate small T)."""
    if tm is None:
        per_col = 8 * HIDDEN * 4 + 2 * 2 * T * itemsize + 16   # live f32 + dbl-buffered x
        tm = int(_TILE_BUDGET // per_col)
    return max(128, min(16384, (int(tm) // 128) * 128))


def make_params(key, num_timesteps):
    ks = jax.random.split(key, 12)
    scale = 0.1
    # mu / inv_sc are a deterministic stand-in for self.x_scalar.transform.
    return dict(
        mu=jnp.linspace(0.1, 0.5, num_timesteps, dtype=jnp.float32).reshape(1, -1),
        inv_sc=(1.0 / jnp.linspace(1.0, 2.0, num_timesteps, dtype=jnp.float32)).reshape(1, -1),
        w11=scale * jax.random.normal(ks[0], (num_timesteps, HIDDEN), jnp.float32),
        b11=scale * jax.random.normal(ks[1], (1, HIDDEN), jnp.float32),
        g11=1.0 + scale * jax.random.normal(ks[2], (1, HIDDEN), jnp.float32),
        be11=scale * jax.random.normal(ks[3], (1, HIDDEN), jnp.float32),
        w12=scale * jax.random.normal(ks[4], (HIDDEN, 1), jnp.float32),
        b12=scale * jax.random.normal(ks[5], (1, 1), jnp.float32),
        w21=scale * jax.random.normal(ks[6], (num_timesteps, HIDDEN), jnp.float32),
        b21=scale * jax.random.normal(ks[7], (1, HIDDEN), jnp.float32),
        g21=1.0 + scale * jax.random.normal(ks[8], (1, HIDDEN), jnp.float32),
        be21=scale * jax.random.normal(ks[9], (1, HIDDEN), jnp.float32),
        w22=scale * jax.random.normal(ks[10], (HIDDEN, 1), jnp.float32),
        b22=scale * jax.random.normal(ks[11], (1, 1), jnp.float32),
        w3=jnp.array([[0.7, -0.3]], dtype=jnp.float32),
        b3=jnp.array([[0.05]], dtype=jnp.float32),
    )


@functools.partial(jax.jit, static_argnames=("tm", "matmul_dtype"))
def velocity_model_nam(upstream, downstream, params, *, tm=None,
                       matmul_dtype=jnp.bfloat16):
    """upstream/downstream: (B, T, S) float32  ->  output (B, S) float32."""
    B, T, S = upstream.shape
    w1, chan, red, scal = _fold_and_pack(params, T, matmul_dtype)
    cols = _pick_cols(T, jnp.dtype(matmul_dtype).itemsize, tm)

    smem_spec = pl.BlockSpec(memory_space=pltpu.MemorySpace.SMEM)

    def cparams(sem):
        return pltpu.CompilerParams(dimension_semantics=sem,
                                    vmem_limit_bytes=_VMEM_LIMIT)

    if S >= 512:
        # ---- Direct path: read (B, T, S) in place — no wrapper transpose. ----
        ts = S if cols >= S else cols                 # cols is a multiple of 128
        if B == 1 and ts == S and S >= 256:           # >= 2 steps for v7x megacore
            ts = (((S + 1) // 2) + 127) // 128 * 128
        grid = (B, pl.cdiv(S, ts))
        out = pl.pallas_call(
            _velocity_kernel,
            out_shape=jax.ShapeDtypeStruct((B, 1, S), jnp.float32),
            grid_spec=pltpu.PrefetchScalarGridSpec(
                num_scalar_prefetch=0, grid=grid,
                in_specs=[
                    smem_spec,
                    pl.BlockSpec((None, T, ts), lambda b, j: (b, 0, j)),
                    pl.BlockSpec((None, T, ts), lambda b, j: (b, 0, j)),
                    pl.BlockSpec((2, HIDDEN, T), lambda b, j: (0, 0, 0)),
                    pl.BlockSpec((2, HIDDEN, 3), lambda b, j: (0, 0, 0)),
                    pl.BlockSpec((2, 8, HIDDEN), lambda b, j: (0, 0, 0)),
                ],
                out_specs=pl.BlockSpec((None, 1, ts), lambda b, j: (b, 0, j)),
            ),
            compiler_params=cparams(("parallel", "parallel")),
        )(scal, upstream, downstream, w1, chan, red)
        return out.reshape(B, S)

    # ---- Fallback path: one fused transpose(+cast); no concat, no pad. ----
    M = B * S
    u_t = jnp.transpose(upstream, (1, 0, 2)).reshape(T, M).astype(matmul_dtype)
    d_t = jnp.transpose(downstream, (1, 0, 2)).reshape(T, M).astype(matmul_dtype)
    if cols >= M:
        # force >= 2 grid steps when M allows it (v7x has 2 TensorCores)
        bm = ((((M + 1) // 2) + 127) // 128 * 128) if M >= 256 else M
    else:
        bm = cols
    grid = (pl.cdiv(M, bm),)
    out = pl.pallas_call(
        _velocity_kernel,
        out_shape=jax.ShapeDtypeStruct((1, M), jnp.float32),
        grid_spec=pltpu.PrefetchScalarGridSpec(
            num_scalar_prefetch=0, grid=grid,
            in_specs=[
                smem_spec,
                pl.BlockSpec((T, bm), lambda i: (0, i)),
                pl.BlockSpec((T, bm), lambda i: (0, i)),
                pl.BlockSpec((2, HIDDEN, T), lambda i: (0, 0, 0)),
                pl.BlockSpec((2, HIDDEN, 3), lambda i: (0, 0, 0)),
                pl.BlockSpec((2, 8, HIDDEN), lambda i: (0, 0, 0)),
            ],
            out_specs=pl.BlockSpec((1, bm), lambda i: (0, i)),
        ),
        compiler_params=cparams(("parallel",)),
    )(scal, u_t, d_t, w1, chan, red)
    return out[0].reshape(B, S)


def _reference(upstream, downstream, p):
    """Pure-JAX reference mirroring the PyTorch forward."""
    def branch(x, w1, b1, g, be, w2, b2):
        h = x @ w1 + b1
        mu = h.mean(-1, keepdims=True)
        var = ((h - mu) ** 2).mean(-1, keepdims=True)
        h = (h - mu) / jnp.sqrt(var + LN_EPS) * g + be
        h = jnp.maximum(h, 0.0)
        return jax.nn.sigmoid(h @ w2 + b2)

    u = jnp.transpose(upstream, (2, 0, 1))
    d = jnp.transpose(downstream, (2, 0, 1))
    u = (u - p["mu"]) * p["inv_sc"]
    d = (d - p["mu"]) * p["inv_sc"]
    yu = branch(u, p["w11"], p["b11"], p["g11"], p["be11"], p["w12"], p["b12"])
    yd = branch(d, p["w21"], p["b21"], p["g21"], p["be21"], p["w22"], p["b22"])
    x = jnp.concatenate([yu, yd], axis=2)
    out = x @ p["w3"].T + p["b3"][0, 0]
    return out[..., 0].T


if __name__ == "__main__":
    key = jax.random.PRNGKey(0)
    k_u, k_d, k_p, k_u2, k_d2 = jax.random.split(key, 5)

    # Small-shape test (S not lane-aligned -> fused-transpose fallback path).
    B, T, S = 4, 8, 80          # batch, num_timesteps_input, sequence length
    upstream = jax.random.normal(k_u, (B, T, S), jnp.float32)
    downstream = jax.random.normal(k_d, (B, T, S), jnp.float32)
    params = make_params(k_p, T)
    ref = _reference(upstream, downstream, params)

    # f32 MXU path, auto tile (forced to 2 grid steps for megacore).
    out_f32 = jax.block_until_ready(
        velocity_model_nam(upstream, downstream, params, matmul_dtype=jnp.float32))
    assert out_f32.shape == (B, S), out_f32.shape
    err = float(jnp.max(jnp.abs(out_f32 - ref)))
    assert err < 5e-4, f"f32 max abs err {err}"

    # bf16 MXU operands, tm=128 exercises a multi-step grid with a partial edge block.
    out_bf16 = jax.block_until_ready(
        velocity_model_nam(upstream, downstream, params, tm=128))
    assert out_bf16.shape == (B, S), out_bf16.shape
    err = float(jnp.max(jnp.abs(out_bf16 - ref)))
    assert err < 1e-2, f"bf16 max abs err {err}"

    # Lane-aligned S exercises the direct (no-transpose) path.
    B2, S2 = 2, 512
    up2 = jax.random.normal(k_u2, (B2, T, S2), jnp.float32)
    dn2 = jax.random.normal(k_d2, (B2, T, S2), jnp.float32)
    ref2 = _reference(up2, dn2, params)
    out2 = jax.block_until_ready(velocity_model_nam(up2, dn2, params))
    assert out2.shape == (B2, S2), out2.shape
    err2 = float(jnp.max(jnp.abs(out2 - ref2)))
    assert err2 < 1e-2, f"direct-path bf16 max abs err {err2}"

    print("KERNEL_OK")
</pallas_src>

<mosaic_0001>
module attributes {stable_mosaic.version = 11 : i64} {
  func.func @_velocity_kernel(%arg0: i32, %arg1: memref<5xf32, #tpu.memory_space<smem>>, %arg2: memref<8x256xf32, #tpu.memory_space<vmem>>, %arg3: memref<8x256xf32, #tpu.memory_space<vmem>>, %arg4: memref<2x64x8xf32, #tpu.memory_space<vmem>>, %arg5: memref<2x64x3xf32, #tpu.memory_space<vmem>>, %arg6: memref<2x8x64xf32, #tpu.memory_space<vmem>>, %arg7: memref<1x256xf32, #tpu.memory_space<vmem>>) attributes {dimension_semantics = [#tpu.dimension_semantics<parallel>], iteration_bounds = array<i64: 2>, scalar_prefetch = 0 : i64, scratch_operands = 0 : i64, tpu.core_type = #tpu.core_type<tc>, window_params = [{transform_indices = @transform_0, window_bounds = array<i64: 5>}, {transform_indices = @transform_1, window_bounds = array<i64: 8, 256>}, {transform_indices = @transform_2, window_bounds = array<i64: 8, 256>}, {pipeline_mode = #tpu.pipeline_mode<synchronous>, transform_indices = @transform_3, window_bounds = array<i64: 2, 64, 8>}, {pipeline_mode = #tpu.pipeline_mode<synchronous>, transform_indices = @transform_4, window_bounds = array<i64: 2, 64, 3>}, {pipeline_mode = #tpu.pipeline_mode<synchronous>, transform_indices = @transform_5, window_bounds = array<i64: 2, 8, 64>}, {transform_indices = @transform_6, window_bounds = array<i64: 1, 256>}]} {
    %c0 = arith.constant 0 : index
    %c0_0 = arith.constant 0 : index
    %0 = vector.load %arg2[%c0, %c0_0] : memref<8x256xf32, #tpu.memory_space<vmem>>, vector<8x256xf32>
    %c0_1 = arith.constant 0 : index
    %1 = memref.load %arg1[%c0_1] : memref<5xf32, #tpu.memory_space<smem>>
    %c0_2 = arith.constant 0 : index
    %c0_3 = arith.constant 0 : index
    %c0_4 = arith.constant 0 : index
    %2 = vector.load %arg4[%c0_2, %c0_3, %c0_4] : memref<2x64x8xf32, #tpu.memory_space<vmem>>, vector<1x64x8xf32>
    %3 = vector.shape_cast %2 : vector<1x64x8xf32> to vector<64x8xf32>
    %cst = arith.constant dense<0.000000e+00> : vector<64x256xf32>
    %4 = tpu.matmul %3, %0, %cst {dimension_numbers = #tpu.dot_dimension_numbers<[1], [0], [0], [1], [0, 0, 1, 1], [], []>} : vector<64x8xf32>, vector<8x256xf32>, vector<64x256xf32> -> vector<64x256xf32>
    %c0_5 = arith.constant 0 : index
    %c0_6 = arith.constant 0 : index
    %c0_7 = arith.constant 0 : index
    %5 = vector.load %arg5[%c0_5, %c0_6, %c0_7] : memref<2x64x3xf32, #tpu.memory_space<vmem>>, vector<1x64x3xf32>
    %6 = vector.shape_cast %5 : vector<1x64x3xf32> to vector<64x3xf32>
    %7 = vector.extract_strided_slice %6 {offsets = [0, 0], sizes = [64, 1], strides = [1, 1]} : vector<64x3xf32> to vector<64x1xf32>
    %8 = vector.broadcast %7 : vector<64x1xf32> to vector<64x256xf32>
    %9 = arith.addf %4, %8 : vector<64x256xf32>
    %c0_8 = arith.constant 0 : index
    %c0_9 = arith.constant 0 : index
    %c0_10 = arith.constant 0 : index
    %10 = vector.load %arg6[%c0_8, %c0_9, %c0_10] : memref<2x8x64xf32, #tpu.memory_space<vmem>>, vector<1x8x64xf32>
    %11 = vector.shape_cast %10 : vector<1x8x64xf32> to vector<8x64xf32>
    %cst_11 = arith.constant dense<0.000000e+00> : vector<8x256xf32>
    %12 = tpu.matmul %11, %9, %cst_11 {dimension_numbers = #tpu.dot_dimension_numbers<[1], [0], [0], [1], [0, 0, 1, 1], [], []>} : vector<8x64xf32>, vector<64x256xf32>, vector<8x256xf32> -> vector<8x256xf32>
    %13 = vector.extract_strided_slice %12 {offsets = [0, 0], sizes = [1, 256], strides = [1, 1]} : vector<8x256xf32> to vector<1x256xf32>
    %14 = vector.broadcast %13 : vector<1x256xf32> to vector<64x256xf32>
    %15 = arith.subf %9, %14 : vector<64x256xf32>
    %16 = arith.mulf %15, %15 : vector<64x256xf32>
    %cst_12 = arith.constant dense<0.000000e+00> : vector<8x256xf32>
    %17 = tpu.matmul %11, %16, %cst_12 {dimension_numbers = #tpu.dot_dimension_numbers<[1], [0], [0], [1], [0, 0, 1, 1], [], []>} : vector<8x64xf32>, vector<64x256xf32>, vector<8x256xf32> -> vector<8x256xf32>
    %18 = vector.extract_strided_slice %17 {offsets = [0, 0], sizes = [1, 256], strides = [1, 1]} : vector<8x256xf32> to vector<1x256xf32>
    %cst_13 = arith.constant 9.99999974E-6 : f32
    %19 = vector.broadcast %cst_13 : f32 to vector<1x256xf32>
    %20 = arith.addf %18, %19 : vector<1x256xf32>
    %21 = math.rsqrt %20 : vector<1x256xf32>
    %22 = vector.extract_strided_slice %6 {offsets = [0, 1], sizes = [64, 1], strides = [1, 1]} : vector<64x3xf32> to vector<64x1xf32>
    %23 = vector.broadcast %22 : vector<64x1xf32> to vector<64x256xf32>
    %24 = arith.mulf %15, %23 : vector<64x256xf32>
    %25 = vector.broadcast %21 : vector<1x256xf32> to vector<64x256xf32>
    %26 = arith.mulf %24, %25 : vector<64x256xf32>
    %27 = vector.extract_strided_slice %6 {offsets = [0, 2], sizes = [64, 1], strides = [1, 1]} : vector<64x3xf32> to vector<64x1xf32>
    %28 = vector.broadcast %27 : vector<64x1xf32> to vector<64x256xf32>
    %29 = arith.addf %26, %28 : vector<64x256xf32>
    %cst_14 = arith.constant 0.000000e+00 : f32
    %30 = vector.broadcast %cst_14 : f32 to vector<64x256xf32>
    %31 = arith.maximumf %29, %30 : vector<64x256xf32>
    %cst_15 = arith.constant dense<0.000000e+00> : vector<8x256xf32>
    %32 = tpu.matmul %11, %31, %cst_15 {dimension_numbers = #tpu.dot_dimension_numbers<[1], [0], [0], [1], [0, 0, 1, 1], [], []>} : vector<8x64xf32>, vector<64x256xf32>, vector<8x256xf32> -> vector<8x256xf32>
    %33 = vector.extract_strided_slice %32 {offsets = [1, 0], sizes = [1, 256], strides = [1, 1]} : vector<8x256xf32> to vector<1x256xf32>
    %34 = vector.broadcast %1 : f32 to vector<1x256xf32>
    %35 = arith.addf %33, %34 : vector<1x256xf32>
    %36 = arith.negf %35 : vector<1x256xf32>
    %37 = math.exp %36 : vector<1x256xf32>
    %cst_16 = arith.constant 1.000000e+00 : f32
    %38 = vector.broadcast %cst_16 : f32 to vector<1x256xf32>
    %39 = arith.addf %38, %37 : vector<1x256xf32>
    %40 = arith.divf %38, %39 : vector<1x256xf32>
    %c0_17 = arith.constant 0 : index
    %c0_18 = arith.constant 0 : index
    %41 = vector.load %arg3[%c0_17, %c0_18] : memref<8x256xf32, #tpu.memory_space<vmem>>, vector<8x256xf32>
    %c1 = arith.constant 1 : index
    %42 = memref.load %arg1[%c1] : memref<5xf32, #tpu.memory_space<smem>>
    %c1_19 = arith.constant 1 : index
    %c0_20 = arith.constant 0 : index
    %c0_21 = arith.constant 0 : index
    %43 = vector.load %arg4[%c1_19, %c0_20, %c0_21] : memref<2x64x8xf32, #tpu.memory_space<vmem>>, vector<1x64x8xf32>
    %44 = vector.shape_cast %43 : vector<1x64x8xf32> to vector<64x8xf32>
    %cst_22 = arith.constant dense<0.000000e+00> : vector<64x256xf32>
    %45 = tpu.matmul %44, %41, %cst_22 {dimension_numbers = #tpu.dot_dimension_numbers<[1], [0], [0], [1], [0, 0, 1, 1], [], []>} : vector<64x8xf32>, vector<8x256xf32>, vector<64x256xf32> -> vector<64x256xf32>
    %c1_23 = arith.constant 1 : index
    %c0_24 = arith.constant 0 : index
    %c0_25 = arith.constant 0 : index
    %46 = vector.load %arg5[%c1_23, %c0_24, %c0_25] : memref<2x64x3xf32, #tpu.memory_space<vmem>>, vector<1x64x3xf32>
    %47 = vector.shape_cast %46 : vector<1x64x3xf32> to vector<64x3xf32>
    %48 = vector.extract_strided_slice %47 {offsets = [0, 0], sizes = [64, 1], strides = [1, 1]} : vector<64x3xf32> to vector<64x1xf32>
    %49 = vector.broadcast %48 : vector<64x1xf32> to vector<64x256xf32>
    %50 = arith.addf %45, %49 : vector<64x256xf32>
    %c1_26 = arith.constant 1 : index
    %c0_27 = arith.constant 0 : index
    %c0_28 = arith.constant 0 : index
    %51 = vector.load %arg6[%c1_26, %c0_27, %c0_28] : memref<2x8x64xf32, #tpu.memory_space<vmem>>, vector<1x8x64xf32>
    %52 = vector.shape_cast %51 : vector<1x8x64xf32> to vector<8x64xf32>
    %cst_29 = arith.constant dense<0.000000e+00> : vector<8x256xf32>
    %53 = tpu.matmul %52, %50, %cst_29 {dimension_numbers = #tpu.dot_dimension_numbers<[1], [0], [0], [1], [0, 0, 1, 1], [], []>} : vector<8x64xf32>, vector<64x256xf32>, vector<8x256xf32> -> vector<8x256xf32>
    %54 = vector.extract_strided_slice %53 {offsets = [0, 0], sizes = [1, 256], strides = [1, 1]} : vector<8x256xf32> to vector<1x256xf32>
    %55 = vector.broadcast %54 : vector<1x256xf32> to vector<64x256xf32>
    %56 = arith.subf %50, %55 : vector<64x256xf32>
    %57 = arith.mulf %56, %56 : vector<64x256xf32>
    %cst_30 = arith.constant dense<0.000000e+00> : vector<8x256xf32>
    %58 = tpu.matmul %52, %57, %cst_30 {dimension_numbers = #tpu.dot_dimension_numbers<[1], [0], [0], [1], [0, 0, 1, 1], [], []>} : vector<8x64xf32>, vector<64x256xf32>, vector<8x256xf32> -> vector<8x256xf32>
    %59 = vector.extract_strided_slice %58 {offsets = [0, 0], sizes = [1, 256], strides = [1, 1]} : vector<8x256xf32> to vector<1x256xf32>
    %cst_31 = arith.constant 9.99999974E-6 : f32
    %60 = vector.broadcast %cst_31 : f32 to vector<1x256xf32>
    %61 = arith.addf %59, %60 : vector<1x256xf32>
    %62 = math.rsqrt %61 : vector<1x256xf32>
    %63 = vector.extract_strided_slice %47 {offsets = [0, 1], sizes = [64, 1], strides = [1, 1]} : vector<64x3xf32> to vector<64x1xf32>
    %64 = vector.broadcast %63 : vector<64x1xf32> to vector<64x256xf32>
    %65 = arith.mulf %56, %64 : vector<64x256xf32>
    %66 = vector.broadcast %62 : vector<1x256xf32> to vector<64x256xf32>
    %67 = arith.mulf %65, %66 : vector<64x256xf32>
    %68 = vector.extract_strided_slice %47 {offsets = [0, 2], sizes = [64, 1], strides = [1, 1]} : vector<64x3xf32> to vector<64x1xf32>
    %69 = vector.broadcast %68 : vector<64x1xf32> to vector<64x256xf32>
    %70 = arith.addf %67, %69 : vector<64x256xf32>
    %cst_32 = arith.constant 0.000000e+00 : f32
    %71 = vector.broadcast %cst_32 : f32 to vector<64x256xf32>
    %72 = arith.maximumf %70, %71 : vector<64x256xf32>
    %cst_33 = arith.constant dense<0.000000e+00> : vector<8x256xf32>
    %73 = tpu.matmul %52, %72, %cst_33 {dimension_numbers = #tpu.dot_dimension_numbers<[1], [0], [0], [1], [0, 0, 1, 1], [], []>} : vector<8x64xf32>, vector<64x256xf32>, vector<8x256xf32> -> vector<8x256xf32>
    %74 = vector.extract_strided_slice %73 {offsets = [1, 0], sizes = [1, 256], strides = [1, 1]} : vector<8x256xf32> to vector<1x256xf32>
    %75 = vector.broadcast %42 : f32 to vector<1x256xf32>
    %76 = arith.addf %74, %75 : vector<1x256xf32>
    %77 = arith.negf %76 : vector<1x256xf32>
    %78 = math.exp %77 : vector<1x256xf32>
    %cst_34 = arith.constant 1.000000e+00 : f32
    %79 = vector.broadcast %cst_34 : f32 to vector<1x256xf32>
    %80 = arith.addf %79, %78 : vector<1x256xf32>
    %81 = arith.divf %79, %80 : vector<1x256xf32>
    %c2 = arith.constant 2 : index
    %82 = memref.load %arg1[%c2] : memref<5xf32, #tpu.memory_space<smem>>
    %83 = vector.broadcast %82 : f32 to vector<1x256xf32>
    %84 = arith.mulf %40, %83 : vector<1x256xf32>
    %c3 = arith.constant 3 : index
    %85 = memref.load %arg1[%c3] : memref<5xf32, #tpu.memory_space<smem>>
    %86 = vector.broadcast %85 : f32 to vector<1x256xf32>
    %87 = arith.mulf %81, %86 : vector<1x256xf32>
    %88 = arith.addf %84, %87 : vector<1x256xf32>
    %c4 = arith.constant 4 : index
    %89 = memref.load %arg1[%c4] : memref<5xf32, #tpu.memory_space<smem>>
    %90 = vector.broadcast %89 : f32 to vector<1x256xf32>
    %91 = arith.addf %88, %90 : vector<1x256xf32>
    %c0_35 = arith.constant 0 : index
    %c0_36 = arith.constant 0 : index
    %92 = vector.load %arg7[%c0_35, %c0_36] : memref<1x256xf32, #tpu.memory_space<vmem>>, vector<1x256xf32>
    tpu.vector_store %arg7[%c0_35, %c0_36], %91 {strides = array<i32>} : memref<1x256xf32, #tpu.memory_space<vmem>>, vector<1x256xf32>,
    return
  }
  func.func @transform_0(%arg0: i32) -> i32 {
    %c0_i32 = arith.constant 0 : i32
    %c0_i32_0 = arith.constant 0 : i32
    return %c0_i32 : i32
  }
  func.func @transform_1(%arg0: i32) -> (i32, i32) {
    %c0_i32 = arith.constant 0 : i32
    %c0_i32_0 = arith.constant 0 : i32
    return %c0_i32, %arg0 : i32, i32
  }
  func.func @transform_2(%arg0: i32) -> (i32, i32) {
    %c0_i32 = arith.constant 0 : i32
    %c0_i32_0 = arith.constant 0 : i32
    return %c0_i32, %arg0 : i32, i32
  }
  func.func @transform_3(%arg0: i32) -> (i32, i32, i32) {
    %c0_i32 = arith.constant 0 : i32
    %c0_i32_0 = arith.constant 0 : i32
    %c0_i32_1 = arith.constant 0 : i32
    %c0_i32_2 = arith.constant 0 : i32
    return %c0_i32, %c0_i32_0, %c0_i32_1 : i32, i32, i32
  }
  func.func @transform_4(%arg0: i32) -> (i32, i32, i32) {
    %c0_i32 = arith.constant 0 : i32
    %c0_i32_0 = arith.constant 0 : i32
    %c0_i32_1 = arith.constant 0 : i32
    %c0_i32_2 = arith.constant 0 : i32
    return %c0_i32, %c0_i32_0, %c0_i32_1 : i32, i32, i32
  }
  func.func @transform_5(%arg0: i32) -> (i32, i32, i32) {
    %c0_i32 = arith.constant 0 : i32
    %c0_i32_0 = arith.constant 0 : i32
    %c0_i32_1 = arith.constant 0 : i32
    %c0_i32_2 = arith.constant 0 : i32
    return %c0_i32, %c0_i32_0, %c0_i32_1 : i32, i32, i32
  }
  func.func @transform_6(%arg0: i32) -> (i32, i32) {
    %c0_i32 = arith.constant 0 : i32
    %c0_i32_0 = arith.constant 0 : i32
    return %c0_i32, %arg0 : i32, i32
  }
}

</mosaic_0001>

<llo_original>
// kernel: squeeze.11
$region0: #{squeeze.11}
  %s0 = inlined_call_operand.vmem [shape: f32[320], index: 0, kind: input, shape index: {}]
  %s1 = inlined_call_operand.hbm [shape: f32[4,80], index: 1, kind: output, shape index: {}]
  $region1: #{squeeze.11} parent=0
    #allocation0 [shape = 'u8[2048]{0}', space=vmem, size = 0x800, scoped, tag = 'operand span for operand 1']
    #allocation1 [shape = 's32[1]{0}', space=sflag, size = 0x4, scoped, tag = 'scoped memory for squeeze.11']
    #allocation2 [shape = 'u8[4096]{0}', space=vmem, size = 0x1000, scoped, tag = 'scoped mem for output reshape']
    #allocation3 [shape = 'u8[4096]{0}', space=vmem, size = 0x1000, scoped, tag = 'scoped mem for input reshape']
    %2 = vsyncpa [#allocation1], 0
    %s4 = sshll.u32 1, 4
    %s5 = ssub.s32 %s4, 1
    %v6 = vld [vmem:[%s0] sm:%s5]
    %7 = vst [vmem:[#allocation3] sm:%s5] %v6
    %v8 = vld [vmem:[#allocation3] sm:$0x1]
    %vm9 = vcmask 654336
    %10 = vst.msk [vmem:[#allocation2] sm:$0x1] %vm9, %v8
    %s11 = scalar_lea.vmem [#allocation3], 1
    %v12 = vld [vmem:[%s11] sm:$0x1]
    %13 = vrot.lane.b32.xlu0 %v12, 96
    %v14 = vpop.permute.xlu0 %13
    %vm15 = vcmask 654336
    %s16 = scalar_lea.vmem [#allocation2], 2
    %17 = vst.msk [vmem:[%s16] sm:$0x1] %vm15, %v14
    %v18 = vld [vmem:[#allocation3] sm:$0x1]
    %s19 = scalar_lea.vmem [#allocation3], 1
    %v20 = vld [vmem:[%s19] sm:$0x1]
    %vm21 = vcmask 654336
    %v22 = vsel %vm21, %v20, %v18
    %23 = vrot.lane.b32.xlu0 %v22, 48
    %v24 = vpop.permute.xlu0 %23
    %vm25 = vcmask 392192
    %s26 = scalar_lea.vmem [#allocation2], 1
    %27 = vst.msk [vmem:[%s26] sm:$0x1] %vm25, %v24
    %vm28 = vcmask 654720
    %s29 = scalar_lea.vmem [#allocation2], 1
    %30 = vst.msk [vmem:[%s29] sm:$0x1] %vm28, %v24
    %s31 = scalar_lea.vmem [#allocation3], 1
    %v32 = vld [vmem:[%s31] sm:$0x1]
    %s33 = scalar_lea.vmem [#allocation3], 2
    %v34 = vld [vmem:[%s33] sm:$0x1]
    %vm35 = vcmask 916480
    %v36 = vsel %vm35, %v34, %v32
    %37 = vrot.lane.b32.xlu0 %v36, 16
    %v38 = vpop.permute.xlu0 %37
    %vm39 = vcmask 130048
    %s40 = scalar_lea.vmem [#allocation2], 3
    %41 = vst.msk [vmem:[%s40] sm:$0x1] %vm39, %v38
    %vm42 = vcmask 654464
    %s43 = scalar_lea.vmem [#allocation2], 3
    %44 = vst.msk [vmem:[%s43] sm:$0x1] %vm42, %v38
    %s46 = sshll.u32 1, 4
    %s47 = ssub.s32 %s46, 1
    %v49 = vld [vmem:[#allocation2] sm:%s47]
    %s50 = sshll.u32 1, 4
    %s51 = ssub.s32 %s50, 1
    %52 = vst [vmem:[#allocation0] sm:%s51] %v49
    %s54 = ssub.s32 64, 64
    %55 = vsyncadd [#allocation1], %s54
    %s57 = sshll.u32 [#allocation0], 4
    %s58 = int_to_ptr.vmem [resolvable:$true] %s57
    %60 = dma.vmem_to_hbm [thread:$0]  %s58, 64, %s1, [#allocation1]
    %61 = dma.done [#allocation1], 64
    %62 = vsyncpa [#allocation1], 1

// kernel: velocity_model_nam.1
$region0: #{velocity_model_nam.1}
  #allocation0 [shape = 'u32[]', space=smem, size = 0x4, offset = 0x4, fixed_abs, tag = 'smem constant byte address 0x4 - core index']
  #allocation1 [shape = 'u32[144,128]{1,0:T(1,128)}', space=vmem, size = 0x12000, scoped, tag = 'internal scratch']
  %s0 = inlined_call_operand.vmem [shape: f32[5], index: 0, kind: input, shape index: {}]
  %s1 = inlined_call_operand.vmem [shape: f32[8,320], index: 1, kind: input, shape index: {}]
  %s2 = inlined_call_operand.vmem [shape: f32[8,320], index: 2, kind: input, shape index: {}]
  %s3 = inlined_call_operand.vmem [shape: f32[2,64,8], index: 3, kind: input, shape index: {}]
  %s4 = inlined_call_operand.vmem [shape: f32[2,64,3], index: 4, kind: input, shape index: {}]
  %s5 = inlined_call_operand.vmem [shape: f32[2,8,64], index: 5, kind: input, shape index: {}]
  %s6 = inlined_call_operand.vmem [shape: f32[1,320], index: 6, kind: output, shape index: {}]
  %s7 = sld [smem:[#allocation0]]
  $region123: #{velocity_model_nam.1} parent=0
    _
  %s9 = ssub.s32 1, %s7
  %s10 = scalar_select 0, %s9, %s7
  $region1: #{velocity_model_nam.1} parent=0
    #allocation2 [shape = 'u8[512]{0}', space=smem, size = 0x200, scoped, tag = 'input window, operand 0, single buffered']
    #allocation3 [shape = 's32[2]{0}', space=sflag, size = 0x8, scoped, tag = 'scoped memory for velocity_model_nam.1']
    #allocation4 [shape = 'u8[2048]{0}', space=vmem, size = 0x800, scoped, tag = 'output window, operand 0']
    %11 = vsyncpa [#allocation3], 0
    loop: start=0, step=1, limit=4
    $region2: #{velocity_model_nam.1} parent=1 // loop_pre_header
      _
    $region3: #{velocity_model_nam.1} parent=1 // loop_header
      %s13 = sphi 0, %s17
      %p14 = scmp.ge.s32.totalorder %s13, 4
      %s21 = sphi 0, %s21
      %s23 = sphi 0, %s21
      %s24 = sphi 0, %s23
      %s38 = sphi 0, %s24
      %s44 = sphi 0, %s46
      %s47 = sphi 0, %s44
      %s48 = sphi 0, %s47
      %s64 = sphi 0, %s48
      %s70 = sphi 0, %s72
      %s73 = sphi 0, %s70
      %s74 = sphi 0, %s73
      %s90 = sphi 0, %s74
      %s94 = sphi 0, %s94
      %s96 = sphi 0, %s94
      %s97 = sphi 0, %s96
      %s111 = sphi 0, %s97
      %s115 = sphi 0, %s115
      %s117 = sphi 0, %s115
      %s118 = sphi 0, %s117
      %s132 = sphi 0, %s118
      %s136 = sphi 0, %s136
      %s138 = sphi 0, %s136
      %s139 = sphi 0, %s138
      %s153 = sphi 0, %s139
      %s159 = sphi 0, %s161
      %s162 = sphi 0, %s159
      %s163 = sphi 0, %s162
      %s179 = sphi 0, %s163
    $region4: #{velocity_model_nam.1} parent=1 // loop_header_branch
      %16 = sbr.rel (%p14) target = $region8
    $region5: #{velocity_model_nam.1} parent=1 // loop_body
      %s18 = ssub.s32 %s13, 1
      %s19 = ssub.s32 %s13, 2
      %s20 = sadd.s32 %s13, 1
      %s22 = sadd.s32 %s21, 1
      %p25 = scmp.eq.s32.totalorder %s13, 1
      %p26 = scmp.ne.s32.totalorder %s21, %s23
      %p27 = scmp.eq.s32.totalorder %s13, 0
      %p28 = por %p26, %p27
      %p29 = scmp.ne.s32.totalorder %s21, %s23
      %p30 = scmp.eq.s32.totalorder %s18, 1
      %p31 = por %p29, %p30
      %p32 = scmp.ne.s32.totalorder %s23, %s24
      %p33 = scmp.eq.s32.totalorder %s18, 0
      %p34 = por %p32, %p33
      %p35 = scmp.ne.s32.totalorder %s23, %s24
      %p36 = scmp.eq.s32.totalorder %s19, 1
      %p37 = por %p35, %p36
      %p39 = scmp.ne.s32.totalorder %s24, %s38
      %p40 = scmp.eq.s32.totalorder %s19, 0
      %p41 = por %p39, %p40
      %s42 = ssub.s32 %s13, %s20
      %p43 = scmp.eq.s32.totalorder %s42, 0
      %s45 = sadd.s32 %s44, 1
      %s46 = scalar_select %p43, %s44, %s45
      %p49 = pneg %p43
      %p50 = scmp.eq.s32.totalorder %s13, 1
      %p51 = por %p49, %p50
      %p52 = scmp.ne.s32.totalorder %s44, %s47
      %p53 = scmp.eq.s32.totalorder %s13, 0
      %p54 = por %p52, %p53
      %p55 = scmp.ne.s32.totalorder %s44, %s47
      %p56 = scmp.eq.s32.totalorder %s18, 1
      %p57 = por %p55, %p56
      %p58 = scmp.ne.s32.totalorder %s47, %s48
      %p59 = scmp.eq.s32.totalorder %s18, 0
      %p60 = por %p58, %p59
      %p61 = scmp.ne.s32.totalorder %s47, %s48
      %p62 = scmp.eq.s32.totalorder %s19, 1
      %p63 = por %p61, %p62
      %p65 = scmp.ne.s32.totalorder %s48, %s64
      %p66 = scmp.eq.s32.totalorder %s19, 0
      %p67 = por %p65, %p66
      %s68 = ssub.s32 %s13, %s20
      %p69 = scmp.eq.s32.totalorder %s68, 0
      %s71 = sadd.s32 %s70, 1
      %s72 = scalar_select %p69, %s70, %s71
      %p75 = pneg %p69
      %p76 = scmp.eq.s32.totalorder %s13, 1
      %p77 = por %p75, %p76
      %p78 = scmp.ne.s32.totalorder %s70, %s73
      %p79 = scmp.eq.s32.totalorder %s13, 0
      %p80 = por %p78, %p79
      %p81 = scmp.ne.s32.totalorder %s70, %s73
      %p82 = scmp.eq.s32.totalorder %s18, 1
      %p83 = por %p81, %p82
      %p84 = scmp.ne.s32.totalorder %s73, %s74
      %p85 = scmp.eq.s32.totalorder %s18, 0
      %p86 = por %p84, %p85
      %p87 = scmp.ne.s32.totalorder %s73, %s74
      %p88 = scmp.eq.s32.totalorder %s19, 1
      %p89 = por %p87, %p88
      %p91 = scmp.ne.s32.totalorder %s74, %s90
      %p92 = scmp.eq.s32.totalorder %s19, 0
      %p93 = por %p91, %p92
      %s95 = sadd.s32 %s94, 1
      %p98 = scmp.eq.s32.totalorder %s13, 1
      %p99 = scmp.ne.s32.totalorder %s94, %s96
      %p100 = scmp.eq.s32.totalorder %s13, 0
      %p101 = por %p99, %p100
      %p102 = scmp.ne.s32.totalorder %s94, %s96
      %p103 = scmp.eq.s32.totalorder %s18, 1
      %p104 = por %p102, %p103
      %p105 = scmp.ne.s32.totalorder %s96, %s97
      %p106 = scmp.eq.s32.totalorder %s18, 0
      %p107 = por %p105, %p106
      %p108 = scmp.ne.s32.totalorder %s96, %s97
      %p109 = scmp.eq.s32.totalorder %s19, 1
      %p110 = por %p108, %p109
      %p112 = scmp.ne.s32.totalorder %s97, %s111
      %p113 = scmp.eq.s32.totalorder %s19, 0
      %p114 = por %p112, %p113
      %s116 = sadd.s32 %s115, 1
      %p119 = scmp.eq.s32.totalorder %s13, 1
      %p120 = scmp.ne.s32.totalorder %s115, %s117
      %p121 = scmp.eq.s32.totalorder %s13, 0
      %p122 = por %p120, %p121
      %p123 = scmp.ne.s32.totalorder %s115, %s117
      %p124 = scmp.eq.s32.totalorder %s18, 1
      %p125 = por %p123, %p124
      %p126 = scmp.ne.s32.totalorder %s117, %s118
      %p127 = scmp.eq.s32.totalorder %s18, 0
      %p128 = por %p126, %p127
      %p129 = scmp.ne.s32.totalorder %s117, %s118
      %p130 = scmp.eq.s32.totalorder %s19, 1
      %p131 = por %p129, %p130
      %p133 = scmp.ne.s32.totalorder %s118, %s132
      %p134 = scmp.eq.s32.totalorder %s19, 0
      %p135 = por %p133, %p134
      %s137 = sadd.s32 %s136, 1
      %p140 = scmp.eq.s32.totalorder %s13, 1
      %p141 = scmp.ne.s32.totalorder %s136, %s138
      %p142 = scmp.eq.s32.totalorder %s13, 0
      %p143 = por %p141, %p142
      %p144 = scmp.ne.s32.totalorder %s136, %s138
      %p145 = scmp.eq.s32.totalorder %s18, 1
      %p146 = por %p144, %p145
      %p147 = scmp.ne.s32.totalorder %s138, %s139
      %p148 = scmp.eq.s32.totalorder %s18, 0
      %p149 = por %p147, %p148
      %p150 = scmp.ne.s32.totalorder %s138, %s139
      %p151 = scmp.eq.s32.totalorder %s19, 1
      %p152 = por %p150, %p151
      %p154 = scmp.ne.s32.totalorder %s139, %s153
      %p155 = scmp.eq.s32.totalorder %s19, 0
      %p156 = por %p154, %p155
      %s157 = ssub.s32 %s13, %s20
      %p158 = scmp.eq.s32.totalorder %s157, 0
      %s160 = sadd.s32 %s159, 1
      %s161 = scalar_select %p158, %s159, %s160
      %p164 = pneg %p158
      %p165 = scmp.eq.s32.totalorder %s13, 1
      %p166 = por %p164, %p165
      %p167 = scmp.ne.s32.totalorder %s159, %s162
      %p168 = scmp.eq.s32.totalorder %s13, 0
      %p169 = por %p167, %p168
      %p170 = scmp.ne.s32.totalorder %s159, %s162
      %p171 = scmp.eq.s32.totalorder %s18, 1
      %p172 = por %p170, %p171
      %p173 = scmp.ne.s32.totalorder %s162, %s163
      %p174 = scmp.eq.s32.totalorder %s18, 0
      %p175 = por %p173, %p174
      %p176 = scmp.ne.s32.totalorder %s162, %s163
      %p177 = scmp.eq.s32.totalorder %s19, 1
      %p178 = por %p176, %p177
      %p180 = scmp.ne.s32.totalorder %s163, %s179
      %p181 = scmp.eq.s32.totalorder %s19, 0
      %p182 = por %p180, %p181
      %p183 = scmp.le.s32.totalorder 1, %s13
      %p184 = scmp.lt.s32.totalorder %s13, 3
      %p185 = pnand %p183, %p184
      %p186 = pneg %p185
      // Predicated region
      $region9: #{velocity_model_nam.1} parent=5 // pred_check
        _
      $region10: #{velocity_model_nam.1} parent=5 // pred_check_branch
        %188 = sbr.rel (%p185) target = $region12
      $region11: #{velocity_model_nam.1} parent=5 // pred_region
        %s189 = ssub.s32 %s13, 1
        // Predicated region
        $region13: #{velocity_model_nam.1} parent=11 // pred_check
          %p190 = pneg %p34
        $region14: #{velocity_model_nam.1} parent=11 // pred_check_branch
          %192 = sbr.rel (%p190) target = $region16
        $region15: #{velocity_model_nam.1} parent=11 // pred_region
          %s194 = ssub.s32 16, 16
          %195 = vsyncadd [#allocation3], %s194
          %s197 = sshll.u32 %s0, 4
          %s198 = int_to_ptr.vmem [resolvable:$true] %s197
          %200 = dma.vmem_to_smem %s198, 16, [#allocation2], [#allocation3]
        $region16: #{velocity_model_nam.1} parent=11 // pred_fallthru
          _
        // Predicated region
        $region17: #{velocity_model_nam.1} parent=11 // pred_check
          %p201 = pneg %p107
        $region18: #{velocity_model_nam.1} parent=11 // pred_check_branch
          %203 = sbr.rel (%p201) target = $region20
        $region19: #{velocity_model_nam.1} parent=11 // pred_region
          _
        $region20: #{velocity_model_nam.1} parent=11 // pred_fallthru
          _
        // Predicated region
        $region21: #{velocity_model_nam.1} parent=11 // pred_check
          %p204 = pneg %p128
        $region22: #{velocity_model_nam.1} parent=11 // pred_check_branch
          %206 = sbr.rel (%p204) target = $region24
        $region23: #{velocity_model_nam.1} parent=11 // pred_region
          _
        $region24: #{velocity_model_nam.1} parent=11 // pred_fallthru
          _
        // Predicated region
        $region25: #{velocity_model_nam.1} parent=11 // pred_check
          %p207 = pneg %p149
        $region26: #{velocity_model_nam.1} parent=11 // pred_check_branch
          %209 = sbr.rel (%p207) target = $region28
        $region27: #{velocity_model_nam.1} parent=11 // pred_region
          _
        $region28: #{velocity_model_nam.1} parent=11 // pred_fallthru
          _
      $region12: #{velocity_model_nam.1} parent=5 // pred_fallthru
        _
      %p210 = scmp.lt.s32.totalorder %s13, 2
      // Predicated region
      $region29: #{velocity_model_nam.1} parent=5 // pred_check
        %p211 = pneg %p210
      $region30: #{velocity_model_nam.1} parent=5 // pred_check_branch
        %213 = sbr.rel (%p211) target = $region32
      $region31: #{velocity_model_nam.1} parent=5 // pred_region
        // Predicated region
        $region33: #{velocity_model_nam.1} parent=31 // pred_check
          %p214 = pneg %p54
        $region34: #{velocity_model_nam.1} parent=31 // pred_check_branch
          %216 = sbr.rel (%p214) target = $region36
        $region35: #{velocity_model_nam.1} parent=31 // pred_region
          %s217 = smul.u32 2, %s13
          %s218 = ssub.s32 3, %s217
          %p219 = scmp.lt.s32.totalorder %s218, 2
          %s220 = scalar_select %p219, %s218, 2
          %s221 = smul.u32 128, %s220
          %p222 = scmp.lt.s32.totalorder %s217, 2
          %s223 = scalar_select %p222, %s217, 2
          %s224 = smul.addr %s223, 8
          %s225 = scalar_lea.vmem %s1, %s224
          %s226 = smul.u32 2, %s13
          %s227 = ssub.s32 3, %s226
          %p228 = scmp.lt.s32.totalorder %s227, 2
          %s229 = scalar_select %p228, %s227, 2
          %s230 = smul.u32 128, %s229
        $region36: #{velocity_model_nam.1} parent=31 // pred_fallthru
          _
        // Predicated region
        $region37: #{velocity_model_nam.1} parent=31 // pred_check
          %p231 = pneg %p80
        $region38: #{velocity_model_nam.1} parent=31 // pred_check_branch
          %233 = sbr.rel (%p231) target = $region40
        $region39: #{velocity_model_nam.1} parent=31 // pred_region
          %s234 = smul.u32 2, %s13
          %s235 = ssub.s32 3, %s234
          %p236 = scmp.lt.s32.totalorder %s235, 2
          %s237 = scalar_select %p236, %s235, 2
          %s238 = smul.u32 128, %s237
          %p239 = scmp.lt.s32.totalorder %s234, 2
          %s240 = scalar_select %p239, %s234, 2
          %s241 = smul.addr %s240, 8
          %s242 = scalar_lea.vmem %s2, %s241
          %s243 = smul.u32 2, %s13
          %s244 = ssub.s32 3, %s243
          %p245 = scmp.lt.s32.totalorder %s244, 2
          %s246 = scalar_select %p245, %s244, 2
          %s247 = smul.u32 128, %s246
        $region40: #{velocity_model_nam.1} parent=31 // pred_fallthru
          _
      $region32: #{velocity_model_nam.1} parent=5 // pred_fallthru
        _
      %p248 = scmp.le.s32.totalorder 1, %s13
      %p249 = scmp.lt.s32.totalorder %s13, 3
      %p250 = pnand %p248, %p249
      %p251 = pneg %p250
      // Predicated region
      $region41: #{velocity_model_nam.1} parent=5 // pred_check
        _
      $region42: #{velocity_model_nam.1} parent=5 // pred_check_branch
        %253 = sbr.rel (%p250) target = $region44
      $region43: #{velocity_model_nam.1} parent=5 // pred_region
        %s254 = ssub.s32 %s13, 1
        // Predicated region
        $region45: #{velocity_model_nam.1} parent=43 // pred_check
          %p255 = pneg %p34
        $region46: #{velocity_model_nam.1} parent=43 // pred_check_branch
          %257 = sbr.rel (%p255) target = $region48
        $region47: #{velocity_model_nam.1} parent=43 // pred_region
          %258 = dma.done [#allocation3], 16
        $region48: #{velocity_model_nam.1} parent=43 // pred_fallthru
          _
        %259 = sfence
        %p260 = pneg %p34
        %p261 = pneg %p31
        %s262 = smul.u32 2, %s18
        %s263 = ssub.s32 3, %s262
        %p264 = scmp.lt.s32.totalorder %s263, 2
        %s265 = scalar_select %p264, %s263, 2
        %s266 = smul.u32 128, %s265
        %p267 = scmp.lt.s32.totalorder %s262, 2
        %s268 = scalar_select %p267, %s262, 2
        %s269 = smul.addr %s268, 8
        %s270 = scalar_lea.vmem %s1, %s269
        %p271 = pneg %p60
        %p272 = pneg %p57
        %s273 = smul.u32 2, %s18
        %s274 = ssub.s32 3, %s273
        %p275 = scmp.lt.s32.totalorder %s274, 2
        %s276 = scalar_select %p275, %s274, 2
        %s277 = smul.u32 128, %s276
        %p278 = scmp.lt.s32.totalorder %s273, 2
        %s279 = scalar_select %p278, %s273, 2
        %s280 = smul.addr %s279, 8
        %s281 = scalar_lea.vmem %s2, %s280
        %p282 = pneg %p86
        %p283 = pneg %p83
        %p284 = pneg %p107
        %p285 = pneg %p104
        %p286 = pneg %p128
        %p287 = pneg %p125
        %p288 = pneg %p149
        %p289 = pneg %p146
        %p290 = pneg %p175
        %p291 = pneg %p172
        %s292 = sand.u32 %s162, 1
        %s293 = sand.u32 %s162, 1
        %s294 = smul.addr %s293, 2
        %s295 = scalar_lea.vmem [#allocation4], %s294
        %s296 = smul.u32 2, %s18
        %s297 = ssub.s32 3, %s296
        %p298 = scmp.lt.s32.totalorder %s297, 2
        %s299 = scalar_select %p298, %s297, 2
        %s300 = smul.u32 128, %s299
        %p301 = scmp.lt.s32.totalorder %s296, 2
        %s302 = scalar_select %p301, %s296, 2
        %s303 = smul.addr %s302, 8
        %s304 = scalar_lea.vmem %s1, %s303
        %s305 = smul.u32 2, %s18
        %s306 = ssub.s32 3, %s305
        %p307 = scmp.lt.s32.totalorder %s306, 2
        %s308 = scalar_select %p307, %s306, 2
        %s309 = smul.u32 128, %s308
        %s310 = smul.u32 2, %s18
        %s311 = ssub.s32 3, %s310
        %p312 = scmp.lt.s32.totalorder %s311, 2
        %s313 = scalar_select %p312, %s311, 2
        %s314 = smul.u32 128, %s313
        %p315 = scmp.lt.s32.totalorder %s310, 2
        %s316 = scalar_select %p315, %s310, 2
        %s317 = smul.addr %s316, 8
        %s318 = scalar_lea.vmem %s2, %s317
        %s319 = smul.u32 2, %s18
        %s320 = ssub.s32 3, %s319
        %p321 = scmp.lt.s32.totalorder %s320, 2
        %s322 = scalar_select %p321, %s320, 2
        %s323 = smul.u32 128, %s322
        %s324 = smul.u32 2, %s18
        %s325 = ssub.s32 3, %s324
        %p326 = scmp.lt.s32.totalorder %s325, 2
        %s327 = scalar_select %p326, %s325, 2
        %s328 = smul.u32 16, %s327
        %v329 = vld [vmem:[%s304] sm:$0xff]
        %v330 = vld [vmem:[%s304 + $0x8] sm:$0xff]
        %s331 = sld [smem:[#allocation2]]
        %v332 = vld [vmem:[%s3] sm:$0xff]
        %v333 = vld [vmem:[%s3 + $0x8] sm:$0xff]
        %v334 = vld [vmem:[%s3 + $0x10] sm:$0xff]
        %v335 = vld [vmem:[%s3 + $0x18] sm:$0xff]
        %v336 = vld [vmem:[%s3 + $0x20] sm:$0xff]
        %v337 = vld [vmem:[%s3 + $0x28] sm:$0xff]
        %v338 = vld [vmem:[%s3 + $0x30] sm:$0xff]
        %v339 = vld [vmem:[%s3 + $0x38] sm:$0xff]
        %v340 = vld [vmem:[%s4] sm:$0xff]
        %v341 = vld [vmem:[%s4 + $0x8] sm:$0xff]
        %v342 = vld [vmem:[%s4 + $0x10] sm:$0xff]
        %v343 = vld [vmem:[%s4 + $0x18] sm:$0xff]
        %v344 = vld [vmem:[%s4 + $0x20] sm:$0xff]
        %v345 = vld [vmem:[%s4 + $0x28] sm:$0xff]
        %v346 = vld [vmem:[%s4 + $0x30] sm:$0xff]
        %v347 = vld [vmem:[%s4 + $0x38] sm:$0xff]
        %349 = vset.pattern.permute.xlu0 0
        %350 = vperm.xlu0 %349, %v340
        %v351 = vpop.permute.xlu0 %350
        %354 = vset.pattern.permute.xlu0 0
        %355 = vperm.xlu0 %354, %v341
        %v356 = vpop.permute.xlu0 %355
        %359 = vset.pattern.permute.xlu0 0
        %360 = vperm.xlu0 %359, %v342
        %v361 = vpop.permute.xlu0 %360
        %364 = vset.pattern.permute.xlu0 0
        %365 = vperm.xlu0 %364, %v343
        %v366 = vpop.permute.xlu0 %365
        %369 = vset.pattern.permute.xlu0 0
        %370 = vperm.xlu0 %369, %v344
        %v371 = vpop.permute.xlu0 %370
        %374 = vset.pattern.permute.xlu0 0
        %375 = vperm.xlu0 %374, %v345
        %v376 = vpop.permute.xlu0 %375
        %379 = vset.pattern.permute.xlu0 0
        %380 = vperm.xlu0 %379, %v346
        %v381 = vpop.permute.xlu0 %380
        %384 = vset.pattern.permute.xlu0 0
        %385 = vperm.xlu0 %384, %v347
        %v386 = vpop.permute.xlu0 %385
        %vm388 = vcmask 64512
        %v390 = vsel %vm388, %v332, 0
        %v393 = vsel %vm388, %v333, 0
        %v396 = vsel %vm388, %v334, 0
        %v399 = vsel %vm388, %v335, 0
        %v402 = vsel %vm388, %v336, 0
        %v405 = vsel %vm388, %v337, 0
        %v408 = vsel %vm388, %v338, 0
        %v411 = vsel %vm388, %v339, 0
        %413 = vmatprep.subr.mxu0 0.0
        %414 = vmatpush1.msra.mxu0 0.0
        %415 = vmatprep.subr.mxu0 0.0
        %416 = vmatpush1.msra.mxu0 0.0
        %417 = vmatprep.subr.mxu0 0.0
        %418 = vmatpush1.msra.mxu0 0.0
        %419 = vmatprep.subr.mxu0 0.0
        %420 = vmatpush1.msra.mxu0 0.0
        %421 = vmatprep.subr.mxu0 0.0
        %422 = vmatpush1.msra.mxu0 0.0
        %423 = vmatprep.subr.mxu0 0.0
        %424 = vmatpush1.msra.mxu0 0.0
        %425 = vmatprep.subr.mxu0 0.0
        %426 = vmatpush1.msra.mxu0 0.0
        %427 = vmatprep.subr.mxu0 0.0
        %428 = vmatpush1.msra.mxu0 0.0
        %429 = vmatprep.subr.mxu0 0.0
        %430 = vmatpush1.msra.mxu0 0.0
        %431 = vmatprep.subr.mxu0 0.0
        %432 = vmatpush1.msra.mxu0 0.0
        %433 = vmatprep.subr.mxu0 0.0
        %434 = vmatpush1.msra.mxu0 0.0
        %435 = vmatprep.subr.mxu0 0.0
        %436 = vmatpush1.msra.mxu0 0.0
        %437 = vmatprep.subr.mxu0 0.0
        %438 = vmatpush1.msra.mxu0 0.0
        %439 = vmatprep.subr.mxu0 0.0
        %440 = vmatpush1.msra.mxu0 0.0
        %441 = vmatprep.subr.mxu0 0.0
        %442 = vmatpush1.msra.mxu0 0.0
        %443 = vmatprep.subr.mxu0 %v330
        %444 = vmatpush1.msra.mxu0 %v329
        %445 = vmatprep.subr.mxu0 0.0
        %446 = vmatpush2.msra.mxu0 0.0
        %447 = vmatprep.subr.mxu0 0.0
        %448 = vmatpush2.msra.mxu0 0.0
        %449 = vmatprep.subr.mxu0 0.0
        %450 = vmatpush2.msra.mxu0 0.0
        %451 = vmatprep.subr.mxu0 0.0
        %452 = vmatpush2.msra.mxu0 0.0
        %453 = vmatprep.subr.mxu0 0.0
        %454 = vmatpush2.msra.mxu0 0.0
        %455 = vmatprep.subr.mxu0 0.0
        %456 = vmatpush2.msra.mxu0 0.0
        %457 = vmatprep.subr.mxu0 0.0
        %458 = vmatpush2.msra.mxu0 0.0
        %459 = vmatprep.subr.mxu0 0.0
        %460 = vmatpush2.msra.mxu0 0.0
        %461 = vmatprep.subr.mxu0 0.0
        %462 = vmatpush2.msra.mxu0 0.0
        %463 = vmatprep.subr.mxu0 0.0
        %464 = vmatpush2.msra.mxu0 0.0
        %465 = vmatprep.subr.mxu0 0.0
        %466 = vmatpush2.msra.mxu0 0.0
        %467 = vmatprep.subr.mxu0 0.0
        %468 = vmatpush2.msra.mxu0 0.0
        %469 = vmatprep.subr.mxu0 0.0
        %470 = vmatpush2.msra.mxu0 0.0
        %471 = vmatprep.subr.mxu0 0.0
        %472 = vmatpush2.msra.mxu0 0.0
        %473 = vmatprep.subr.mxu0 0.0
        %474 = vmatpush2.msra.mxu0 0.0
        %475 = vmatprep.subr.mxu0 0.0
        %476 = vmatpush2.msra.mxu0 0.0
        %477 = vmatprep.mubr.f32.mxu0 0.0
        %478 = vmatmul.mubr.f32.gmra.mxu0 %v390
        %v479 = vpop.f32.mrf.mxu0
        %v480 = vadd.f32 %v351, %v479
        %v481 = vpop.f32.mrf.mxu0
        %v482 = vadd.f32 %v351, %v481
        %483 = vmatprep.mubr.f32.mxu0 0.0
        %484 = vmatmul.mubr.f32.gmra.mxu0 %v393
        %v485 = vpop.f32.mrf.mxu0
        %v486 = vadd.f32 %v356, %v485
        %v487 = vpop.f32.mrf.mxu0
        %v488 = vadd.f32 %v356, %v487
        %489 = vmatprep.mubr.f32.mxu0 0.0
        %490 = vmatmul.mubr.f32.gmra.mxu0 %v396
        %v491 = vpop.f32.mrf.mxu0
        %v492 = vadd.f32 %v361, %v491
        %v493 = vpop.f32.mrf.mxu0
        %v494 = vadd.f32 %v361, %v493
        %495 = vmatprep.mubr.f32.mxu0 0.0
        %496 = vmatmul.mubr.f32.gmra.mxu0 %v399
        %v497 = vpop.f32.mrf.mxu0
        %v498 = vadd.f32 %v366, %v497
        %v499 = vpop.f32.mrf.mxu0
        %v500 = vadd.f32 %v366, %v499
        %501 = vmatprep.mubr.f32.mxu0 0.0
        %502 = vmatmul.mubr.f32.gmra.mxu0 %v402
        %v503 = vpop.f32.mrf.mxu0
        %v504 = vadd.f32 %v371, %v503
        %v505 = vpop.f32.mrf.mxu0
        %v506 = vadd.f32 %v371, %v505
        %507 = vmatprep.mubr.f32.mxu0 0.0
        %508 = vmatmul.mubr.f32.gmra.mxu0 %v405
        %v509 = vpop.f32.mrf.mxu0
        %v510 = vadd.f32 %v376, %v509
        %v511 = vpop.f32.mrf.mxu0
        %v512 = vadd.f32 %v376, %v511
        %513 = vmatprep.mubr.f32.mxu0 0.0
        %514 = vmatmul.mubr.f32.gmra.mxu0 %v408
        %v515 = vpop.f32.mrf.mxu0
        %v516 = vadd.f32 %v381, %v515
        %v517 = vpop.f32.mrf.mxu0
        %v518 = vadd.f32 %v381, %v517
        %519 = vmatprep.mubr.f32.mxu0 0.0
        %520 = vmatmul.mubr.f32.gmra.mxu0 %v411
        %v521 = vpop.f32.mrf.mxu0
        %v522 = vadd.f32 %v386, %v521
        %v523 = vpop.f32.mrf.mxu0
        %v524 = vadd.f32 %v386, %v523
        %525 = vdwg.mxu0
        %v526 = vld [vmem:[%s5] sm:$0xff]
        %vm527 = vcmask 523264
        %v529 = vsel %vm527, %v526, 0
        %531 = vmatprep.subr.mxu0 0.0
        %532 = vmatpush1.msra.mxu0 0.0
        %533 = vmatprep.subr.mxu0 0.0
        %534 = vmatpush1.msra.mxu0 0.0
        %535 = vmatprep.subr.mxu0 0.0
        %536 = vmatpush1.msra.mxu0 0.0
        %537 = vmatprep.subr.mxu0 0.0
        %538 = vmatpush1.msra.mxu0 0.0
        %539 = vmatprep.subr.mxu0 0.0
        %540 = vmatpush1.msra.mxu0 0.0
        %541 = vmatprep.subr.mxu0 0.0
        %542 = vmatpush1.msra.mxu0 0.0
        %543 = vmatprep.subr.mxu0 0.0
        %544 = vmatpush1.msra.mxu0 0.0
        %545 = vmatprep.subr.mxu0 0.0
        %546 = vmatpush1.msra.mxu0 0.0
        %547 = vmatprep.subr.mxu0 %v524
        %548 = vmatpush1.msra.mxu0 %v522
        %549 = vmatprep.subr.mxu0 %v518
        %550 = vmatpush1.msra.mxu0 %v516
        %551 = vmatprep.subr.mxu0 %v512
        %552 = vmatpush1.msra.mxu0 %v510
        %553 = vmatprep.subr.mxu0 %v506
        %554 = vmatpush1.msra.mxu0 %v504
        %555 = vmatprep.subr.mxu0 %v500
        %556 = vmatpush1.msra.mxu0 %v498
        %557 = vmatprep.subr.mxu0 %v494
        %558 = vmatpush1.msra.mxu0 %v492
        %559 = vmatprep.subr.mxu0 %v488
        %560 = vmatpush1.msra.mxu0 %v486
        %561 = vmatprep.subr.mxu0 %v482
        %562 = vmatpush1.msra.mxu0 %v480
        %563 = vmatprep.subr.mxu0 0.0
        %564 = vmatpush2.msra.mxu0 0.0
        %565 = vmatprep.subr.mxu0 0.0
        %566 = vmatpush2.msra.mxu0 0.0
        %567 = vmatprep.subr.mxu0 0.0
        %568 = vmatpush2.msra.mxu0 0.0
        %569 = vmatprep.subr.mxu0 0.0
        %570 = vmatpush2.msra.mxu0 0.0
        %571 = vmatprep.subr.mxu0 0.0
        %572 = vmatpush2.msra.mxu0 0.0
        %573 = vmatprep.subr.mxu0 0.0
        %574 = vmatpush2.msra.mxu0 0.0
        %575 = vmatprep.subr.mxu0 0.0
        %576 = vmatpush2.msra.mxu0 0.0
        %577 = vmatprep.subr.mxu0 0.0
        %578 = vmatpush2.msra.mxu0 0.0
        %579 = vmatprep.subr.mxu0 0.0
        %580 = vmatpush2.msra.mxu0 0.0
        %581 = vmatprep.subr.mxu0 0.0
        %582 = vmatpush2.msra.mxu0 0.0
        %583 = vmatprep.subr.mxu0 0.0
        %584 = vmatpush2.msra.mxu0 0.0
        %585 = vmatprep.subr.mxu0 0.0
        %586 = vmatpush2.msra.mxu0 0.0
        %587 = vmatprep.subr.mxu0 0.0
        %588 = vmatpush2.msra.mxu0 0.0
        %589 = vmatprep.subr.mxu0 0.0
        %590 = vmatpush2.msra.mxu0 0.0
        %591 = vmatprep.subr.mxu0 0.0
        %592 = vmatpush2.msra.mxu0 0.0
        %593 = vmatprep.subr.mxu0 0.0
        %594 = vmatpush2.msra.mxu0 0.0
        %595 = vmatprep.mubr.f32.mxu0 0.0
        %596 = vmatmul.mubr.f32.gmra.mxu0 %v529
        %v597 = vpop.f32.mrf.mxu0
        %v598 = vadd.f32 0.0, %v597
        %v599 = vpop.f32.mrf.mxu0
        %v600 = vadd.f32 0.0, %v599
        %601 = vdwg.mxu0
        %v602 = vlaneseq
        %v603 = vshrl.u32 %v602, 7
        %v604 = vsub.s32 0, %v603
        %v605 = vrot.slane %v598, %v604
        %v606 = vlaneseq
        %v607 = vshrl.u32 %v606, 7
        %v608 = vsub.s32 0, %v607
        %v609 = vrot.slane %v600, %v608
        %v610 = vsub.f32 %v480, %v605
        %v611 = vsub.f32 %v482, %v609
        %v612 = vsub.f32 %v486, %v605
        %v613 = vsub.f32 %v488, %v609
        %v614 = vsub.f32 %v492, %v605
        %v615 = vsub.f32 %v494, %v609
        %v616 = vsub.f32 %v498, %v605
        %v617 = vsub.f32 %v500, %v609
        %v618 = vsub.f32 %v504, %v605
        %v619 = vsub.f32 %v506, %v609
        %v620 = vsub.f32 %v510, %v605
        %v621 = vsub.f32 %v512, %v609
        %v622 = vsub.f32 %v516, %v605
        %v623 = vsub.f32 %v518, %v609
        %v624 = vsub.f32 %v522, %v605
        %v625 = vsub.f32 %v524, %v609
        %v626 = vmul.f32 %v610, %v610
        %v627 = vmul.f32 %v611, %v611
        %v628 = vmul.f32 %v612, %v612
        %v629 = vmul.f32 %v613, %v613
        %v630 = vmul.f32 %v614, %v614
        %v631 = vmul.f32 %v615, %v615
        %v632 = vmul.f32 %v616, %v616
        %v633 = vmul.f32 %v617, %v617
        %v634 = vmul.f32 %v618, %v618
        %v635 = vmul.f32 %v619, %v619
        %v636 = vmul.f32 %v620, %v620
        %v637 = vmul.f32 %v621, %v621
        %v638 = vmul.f32 %v622, %v622
        %v639 = vmul.f32 %v623, %v623
        %v640 = vmul.f32 %v624, %v624
        %v641 = vmul.f32 %v625, %v625
        %642 = vmatprep.subr.mxu0 0.0
        %643 = vmatpush1.msra.mxu0 0.0
        %644 = vmatprep.subr.mxu0 0.0
        %645 = vmatpush1.msra.mxu0 0.0
        %646 = vmatprep.subr.mxu0 0.0
        %647 = vmatpush1.msra.mxu0 0.0
        %648 = vmatprep.subr.mxu0 0.0
        %649 = vmatpush1.msra.mxu0 0.0
        %650 = vmatprep.subr.mxu0 0.0
        %651 = vmatpush1.msra.mxu0 0.0
        %652 = vmatprep.subr.mxu0 0.0
        %653 = vmatpush1.msra.mxu0 0.0
        %654 = vmatprep.subr.mxu0 0.0
        %655 = vmatpush1.msra.mxu0 0.0
        %656 = vmatprep.subr.mxu0 0.0
        %657 = vmatpush1.msra.mxu0 0.0
        %658 = vmatprep.subr.mxu0 %v641
        %659 = vmatpush1.msra.mxu0 %v640
        %660 = vmatprep.subr.mxu0 %v639
        %661 = vmatpush1.msra.mxu0 %v638
        %662 = vmatprep.subr.mxu0 %v637
        %663 = vmatpush1.msra.mxu0 %v636
        %664 = vmatprep.subr.mxu0 %v635
        %665 = vmatpush1.msra.mxu0 %v634
        %666 = vmatprep.subr.mxu0 %v633
        %667 = vmatpush1.msra.mxu0 %v632
        %668 = vmatprep.subr.mxu0 %v631
        %669 = vmatpush1.msra.mxu0 %v630
        %670 = vmatprep.subr.mxu0 %v629
        %671 = vmatpush1.msra.mxu0 %v628
        %672 = vmatprep.subr.mxu0 %v627
        %673 = vmatpush1.msra.mxu0 %v626
        %674 = vmatprep.subr.mxu0 0.0
        %675 = vmatpush2.msra.mxu0 0.0
        %676 = vmatprep.subr.mxu0 0.0
        %677 = vmatpush2.msra.mxu0 0.0
        %678 = vmatprep.subr.mxu0 0.0
        %679 = vmatpush2.msra.mxu0 0.0
        %680 = vmatprep.subr.mxu0 0.0
        %681 = vmatpush2.msra.mxu0 0.0
        %682 = vmatprep.subr.mxu0 0.0
        %683 = vmatpush2.msra.mxu0 0.0
        %684 = vmatprep.subr.mxu0 0.0
        %685 = vmatpush2.msra.mxu0 0.0
        %686 = vmatprep.subr.mxu0 0.0
        %687 = vmatpush2.msra.mxu0 0.0
        %688 = vmatprep.subr.mxu0 0.0
        %689 = vmatpush2.msra.mxu0 0.0
        %690 = vmatprep.subr.mxu0 0.0
        %691 = vmatpush2.msra.mxu0 0.0
        %692 = vmatprep.subr.mxu0 0.0
        %693 = vmatpush2.msra.mxu0 0.0
        %694 = vmatprep.subr.mxu0 0.0
        %695 = vmatpush2.msra.mxu0 0.0
        %696 = vmatprep.subr.mxu0 0.0
        %697 = vmatpush2.msra.mxu0 0.0
        %698 = vmatprep.subr.mxu0 0.0
        %699 = vmatpush2.msra.mxu0 0.0
        %700 = vmatprep.subr.mxu0 0.0
        %701 = vmatpush2.msra.mxu0 0.0
        %702 = vmatprep.subr.mxu0 0.0
        %703 = vmatpush2.msra.mxu0 0.0
        %704 = vmatprep.subr.mxu0 0.0
        %705 = vmatpush2.msra.mxu0 0.0
        %706 = vmatprep.mubr.f32.mxu0 0.0
        %707 = vmatmul.mubr.f32.gmra.mxu0 %v529
        %v708 = vpop.f32.mrf.mxu0
        %v709 = vadd.f32 0.0, %v708
        %v710 = vpop.f32.mrf.mxu0
        %v711 = vadd.f32 0.0, %v710
        %712 = vdwg.mxu0
        %v713 = vadd.f32 %v709, 1e-05
        %v714 = vadd.f32 %v711, 1e-05
        %v715 = vrsqrt.pop %v713
        %v716 = vrsqrt.pop %v714
        %717 = vset.pattern.permute.xlu0 1
        %718 = vperm.xlu0 %717, %v340
        %v719 = vpop.permute.xlu0 %718
        %721 = vset.pattern.permute.xlu0 1
        %722 = vperm.xlu0 %721, %v341
        %v723 = vpop.permute.xlu0 %722
        %725 = vset.pattern.permute.xlu0 1
        %726 = vperm.xlu0 %725, %v342
        %v727 = vpop.permute.xlu0 %726
        %729 = vset.pattern.permute.xlu0 1
        %730 = vperm.xlu0 %729, %v343
        %v731 = vpop.permute.xlu0 %730
        %733 = vset.pattern.permute.xlu0 1
        %734 = vperm.xlu0 %733, %v344
        %v735 = vpop.permute.xlu0 %734
        %737 = vset.pattern.permute.xlu0 1
        %738 = vperm.xlu0 %737, %v345
        %v739 = vpop.permute.xlu0 %738
        %741 = vset.pattern.permute.xlu0 1
        %742 = vperm.xlu0 %741, %v346
        %v743 = vpop.permute.xlu0 %742
        %745 = vset.pattern.permute.xlu0 1
        %746 = vperm.xlu0 %745, %v347
        %v747 = vpop.permute.xlu0 %746
        %v749 = vmul.f32 %v610, %v719
        %v750 = vmul.f32 %v611, %v719
        %v751 = vmul.f32 %v612, %v723
        %v752 = vmul.f32 %v613, %v723
        %v753 = vmul.f32 %v614, %v727
        %v754 = vmul.f32 %v615, %v727
        %v755 = vmul.f32 %v616, %v731
        %v756 = vmul.f32 %v617, %v731
        %v757 = vmul.f32 %v618, %v735
        %v758 = vmul.f32 %v619, %v735
        %v759 = vmul.f32 %v620, %v739
        %v760 = vmul.f32 %v621, %v739
        %v761 = vmul.f32 %v622, %v743
        %v762 = vmul.f32 %v623, %v743
        %v763 = vmul.f32 %v624, %v747
        %v764 = vmul.f32 %v625, %v747
        %v765 = vlaneseq
        %v766 = vshrl.u32 %v765, 7
        %v767 = vsub.s32 0, %v766
        %v768 = vrot.slane %v715, %v767
        %v769 = vlaneseq
        %v770 = vshrl.u32 %v769, 7
        %v771 = vsub.s32 0, %v770
        %v772 = vrot.slane %v716, %v771
        %v773 = vmul.f32 %v749, %v768
        %v774 = vmul.f32 %v750, %v772
        %v775 = vmul.f32 %v751, %v768
        %v776 = vmul.f32 %v752, %v772
        %v777 = vmul.f32 %v753, %v768
        %v778 = vmul.f32 %v754, %v772
        %v779 = vmul.f32 %v755, %v768
        %v780 = vmul.f32 %v756, %v772
        %v781 = vmul.f32 %v757, %v768
        %v782 = vmul.f32 %v758, %v772
        %v783 = vmul.f32 %v759, %v768
        %v784 = vmul.f32 %v760, %v772
        %v785 = vmul.f32 %v761, %v768
        %v786 = vmul.f32 %v762, %v772
        %v787 = vmul.f32 %v763, %v768
        %v788 = vmul.f32 %v764, %v772
        %789 = vset.pattern.permute.xlu0 2
        %790 = vperm.xlu0 %789, %v340
        %v791 = vpop.permute.xlu0 %790
        %793 = vset.pattern.permute.xlu0 2
        %794 = vperm.xlu0 %793, %v341
        %v795 = vpop.permute.xlu0 %794
        %797 = vset.pattern.permute.xlu0 2
        %798 = vperm.xlu0 %797, %v342
        %v799 = vpop.permute.xlu0 %798
        %801 = vset.pattern.permute.xlu0 2
        %802 = vperm.xlu0 %801, %v343
        %v803 = vpop.permute.xlu0 %802
        %805 = vset.pattern.permute.xlu0 2
        %806 = vperm.xlu0 %805, %v344
        %v807 = vpop.permute.xlu0 %806
        %809 = vset.pattern.permute.xlu0 2
        %810 = vperm.xlu0 %809, %v345
        %v811 = vpop.permute.xlu0 %810
        %813 = vset.pattern.permute.xlu0 2
        %814 = vperm.xlu0 %813, %v346
        %v815 = vpop.permute.xlu0 %814
        %817 = vset.pattern.permute.xlu0 2
        %818 = vperm.xlu0 %817, %v347
        %v819 = vpop.permute.xlu0 %818
        %v821 = vadd.f32 %v773, %v791
        %v822 = vadd.f32 %v774, %v791
        %v823 = vadd.f32 %v775, %v795
        %v824 = vadd.f32 %v776, %v795
        %v825 = vadd.f32 %v777, %v799
        %v826 = vadd.f32 %v778, %v799
        %v827 = vadd.f32 %v779, %v803
        %v828 = vadd.f32 %v780, %v803
        %v829 = vadd.f32 %v781, %v807
        %v830 = vadd.f32 %v782, %v807
        %v831 = vadd.f32 %v783, %v811
        %v832 = vadd.f32 %v784, %v811
        %v833 = vadd.f32 %v785, %v815
        %v834 = vadd.f32 %v786, %v815
        %v835 = vadd.f32 %v787, %v819
        %v836 = vadd.f32 %v788, %v819
        %v837 = vmax.f32 %v821, 0.0
        %v838 = vmax.f32 %v822, 0.0
        %v839 = vmax.f32 %v823, 0.0
        %v840 = vmax.f32 %v824, 0.0
        %v841 = vmax.f32 %v825, 0.0
        %v842 = vmax.f32 %v826, 0.0
        %v843 = vmax.f32 %v827, 0.0
        %v844 = vmax.f32 %v828, 0.0
        %v845 = vmax.f32 %v829, 0.0
        %v846 = vmax.f32 %v830, 0.0
        %v847 = vmax.f32 %v831, 0.0
        %v848 = vmax.f32 %v832, 0.0
        %v849 = vmax.f32 %v833, 0.0
        %v850 = vmax.f32 %v834, 0.0
        %v851 = vmax.f32 %v835, 0.0
        %v852 = vmax.f32 %v836, 0.0
        %853 = vmatprep.subr.mxu0 0.0
        %854 = vmatpush1.msra.mxu0 0.0
        %855 = vmatprep.subr.mxu0 0.0
        %856 = vmatpush1.msra.mxu0 0.0
        %857 = vmatprep.subr.mxu0 0.0
        %858 = vmatpush1.msra.mxu0 0.0
        %859 = vmatprep.subr.mxu0 0.0
        %860 = vmatpush1.msra.mxu0 0.0
        %861 = vmatprep.subr.mxu0 0.0
        %862 = vmatpush1.msra.mxu0 0.0
        %863 = vmatprep.subr.mxu0 0.0
        %864 = vmatpush1.msra.mxu0 0.0
        %865 = vmatprep.subr.mxu0 0.0
        %866 = vmatpush1.msra.mxu0 0.0
        %867 = vmatprep.subr.mxu0 0.0
        %868 = vmatpush1.msra.mxu0 0.0
        %869 = vmatprep.subr.mxu0 %v852
        %870 = vmatpush1.msra.mxu0 %v851
        %871 = vmatprep.subr.mxu0 %v850
        %872 = vmatpush1.msra.mxu0 %v849
        %873 = vmatprep.subr.mxu0 %v848
        %874 = vmatpush1.msra.mxu0 %v847
        %875 = vmatprep.subr.mxu0 %v846
        %876 = vmatpush1.msra.mxu0 %v845
        %877 = vmatprep.subr.mxu0 %v844
        %878 = vmatpush1.msra.mxu0 %v843
        %879 = vmatprep.subr.mxu0 %v842
        %880 = vmatpush1.msra.mxu0 %v841
        %881 = vmatprep.subr.mxu0 %v840
        %882 = vmatpush1.msra.mxu0 %v839
        %883 = vmatprep.subr.mxu0 %v838
        %884 = vmatpush1.msra.mxu0 %v837
        %885 = vmatprep.subr.mxu0 0.0
        %886 = vmatpush2.msra.mxu0 0.0
        %887 = vmatprep.subr.mxu0 0.0
        %888 = vmatpush2.msra.mxu0 0.0
        %889 = vmatprep.subr.mxu0 0.0
        %890 = vmatpush2.msra.mxu0 0.0
        %891 = vmatprep.subr.mxu0 0.0
        %892 = vmatpush2.msra.mxu0 0.0
        %893 = vmatprep.subr.mxu0 0.0
        %894 = vmatpush2.msra.mxu0 0.0
        %895 = vmatprep.subr.mxu0 0.0
        %896 = vmatpush2.msra.mxu0 0.0
        %897 = vmatprep.subr.mxu0 0.0
        %898 = vmatpush2.msra.mxu0 0.0
        %899 = vmatprep.subr.mxu0 0.0
        %900 = vmatpush2.msra.mxu0 0.0
        %901 = vmatprep.subr.mxu0 0.0
        %902 = vmatpush2.msra.mxu0 0.0
        %903 = vmatprep.subr.mxu0 0.0
        %904 = vmatpush2.msra.mxu0 0.0
        %905 = vmatprep.subr.mxu0 0.0
        %906 = vmatpush2.msra.mxu0 0.0
        %907 = vmatprep.subr.mxu0 0.0
        %908 = vmatpush2.msra.mxu0 0.0
        %909 = vmatprep.subr.mxu0 0.0
        %910 = vmatpush2.msra.mxu0 0.0
        %911 = vmatprep.subr.mxu0 0.0
        %912 = vmatpush2.msra.mxu0 0.0
        %913 = vmatprep.subr.mxu0 0.0
        %914 = vmatpush2.msra.mxu0 0.0
        %915 = vmatprep.subr.mxu0 0.0
        %916 = vmatpush2.msra.mxu0 0.0
        %917 = vmatprep.mubr.f32.mxu0 0.0
        %918 = vmatmul.mubr.f32.gmra.mxu0 %v529
        %v919 = vpop.f32.mrf.mxu0
        %v920 = vadd.f32 0.0, %v919
        %v921 = vpop.f32.mrf.mxu0
        %v922 = vadd.f32 0.0, %v921
        %923 = vdwg.mxu0
        %v924 = vstv %s331
        %v925 = vadd.f32 %v920, %v924
        %v926 = vadd.f32 %v922, %v924
        %v927 = vxor.u32 %v925, 2147483648
        %v928 = vxor.u32 %v926, 2147483648
        %v929 = vmul.f32 %v927, 1.442695
        %v930 = vpow.pop %v929
        %v931 = vmul.f32 %v928, 1.442695
        %v932 = vpow.pop %v931
        %v933 = vadd.f32 %v930, 1.0
        %v934 = vadd.f32 %v932, 1.0
        %v935 = vrcp.pop %v933
        %v936 = vmul.f32 1.0, %v935
        %v937 = vrcp.pop %v934
        %v938 = vmul.f32 1.0, %v937
        %v939 = vld [vmem:[%s318] sm:$0xff]
        %v940 = vld [vmem:[%s318 + $0x8] sm:$0xff]
        %s941 = sld [smem:[#allocation2 + $0x1]]
        %s942 = scalar_lea.vmem %s3, 64
        %v943 = vld [vmem:[%s942] sm:$0xff]
        %v944 = vld [vmem:[%s942 + $0x8] sm:$0xff]
        %v945 = vld [vmem:[%s942 + $0x10] sm:$0xff]
        %v946 = vld [vmem:[%s942 + $0x18] sm:$0xff]
        %v947 = vld [vmem:[%s942 + $0x20] sm:$0xff]
        %v948 = vld [vmem:[%s942 + $0x28] sm:$0xff]
        %v949 = vld [vmem:[%s942 + $0x30] sm:$0xff]
        %v950 = vld [vmem:[%s942 + $0x38] sm:$0xff]
        %s951 = scalar_lea.vmem %s4, 64
        %v952 = vld [vmem:[%s951] sm:$0xff]
        %v953 = vld [vmem:[%s951 + $0x8] sm:$0xff]
        %v954 = vld [vmem:[%s951 + $0x10] sm:$0xff]
        %v955 = vld [vmem:[%s951 + $0x18] sm:$0xff]
        %v956 = vld [vmem:[%s951 + $0x20] sm:$0xff]
        %v957 = vld [vmem:[%s951 + $0x28] sm:$0xff]
        %v958 = vld [vmem:[%s951 + $0x30] sm:$0xff]
        %v959 = vld [vmem:[%s951 + $0x38] sm:$0xff]
        %961 = vset.pattern.permute.xlu0 0
        %962 = vperm.xlu0 %961, %v952
        %v963 = vpop.permute.xlu0 %962
        %966 = vset.pattern.permute.xlu0 0
        %967 = vperm.xlu0 %966, %v953
        %v968 = vpop.permute.xlu0 %967
        %971 = vset.pattern.permute.xlu0 0
        %972 = vperm.xlu0 %971, %v954
        %v973 = vpop.permute.xlu0 %972
        %976 = vset.pattern.permute.xlu0 0
        %977 = vperm.xlu0 %976, %v955
        %v978 = vpop.permute.xlu0 %977
        %981 = vset.pattern.permute.xlu0 0
        %982 = vperm.xlu0 %981, %v956
        %v983 = vpop.permute.xlu0 %982
        %986 = vset.pattern.permute.xlu0 0
        %987 = vperm.xlu0 %986, %v957
        %v988 = vpop.permute.xlu0 %987
        %991 = vset.pattern.permute.xlu0 0
        %992 = vperm.xlu0 %991, %v958
        %v993 = vpop.permute.xlu0 %992
        %996 = vset.pattern.permute.xlu0 0
        %997 = vperm.xlu0 %996, %v959
        %v998 = vpop.permute.xlu0 %997
        %v1001 = vsel %vm388, %v943, 0
        %v1004 = vsel %vm388, %v944, 0
        %v1007 = vsel %vm388, %v945, 0
        %v1010 = vsel %vm388, %v946, 0
        %v1013 = vsel %vm388, %v947, 0
        %v1016 = vsel %vm388, %v948, 0
        %v1019 = vsel %vm388, %v949, 0
        %v1022 = vsel %vm388, %v950, 0
        %1024 = vmatprep.subr.mxu0 0.0
        %1025 = vmatpush1.msra.mxu0 0.0
        %1026 = vmatprep.subr.mxu0 0.0
        %1027 = vmatpush1.msra.mxu0 0.0
        %1028 = vmatprep.subr.mxu0 0.0
        %1029 = vmatpush1.msra.mxu0 0.0
        %1030 = vmatprep.subr.mxu0 0.0
        %1031 = vmatpush1.msra.mxu0 0.0
        %1032 = vmatprep.subr.mxu0 0.0
        %1033 = vmatpush1.msra.mxu0 0.0
        %1034 = vmatprep.subr.mxu0 0.0
        %1035 = vmatpush1.msra.mxu0 0.0
        %1036 = vmatprep.subr.mxu0 0.0
        %1037 = vmatpush1.msra.mxu0 0.0
        %1038 = vmatprep.subr.mxu0 0.0
        %1039 = vmatpush1.msra.mxu0 0.0
        %1040 = vmatprep.subr.mxu0 0.0
        %1041 = vmatpush1.msra.mxu0 0.0
        %1042 = vmatprep.subr.mxu0 0.0
        %1043 = vmatpush1.msra.mxu0 0.0
        %1044 = vmatprep.subr.mxu0 0.0
        %1045 = vmatpush1.msra.mxu0 0.0
        %1046 = vmatprep.subr.mxu0 0.0
        %1047 = vmatpush1.msra.mxu0 0.0
        %1048 = vmatprep.subr.mxu0 0.0
        %1049 = vmatpush1.msra.mxu0 0.0
        %1050 = vmatprep.subr.mxu0 0.0
        %1051 = vmatpush1.msra.mxu0 0.0
        %1052 = vmatprep.subr.mxu0 0.0
        %1053 = vmatpush1.msra.mxu0 0.0
        %1054 = vmatprep.subr.mxu0 %v940
        %1055 = vmatpush1.msra.mxu0 %v939
        %1056 = vmatprep.subr.mxu0 0.0
        %1057 = vmatpush2.msra.mxu0 0.0
        %1058 = vmatprep.subr.mxu0 0.0
        %1059 = vmatpush2.msra.mxu0 0.0
        %1060 = vmatprep.subr.mxu0 0.0
        %1061 = vmatpush2.msra.mxu0 0.0
        %1062 = vmatprep.subr.mxu0 0.0
        %1063 = vmatpush2.msra.mxu0 0.0
        %1064 = vmatprep.subr.mxu0 0.0
        %1065 = vmatpush2.msra.mxu0 0.0
        %1066 = vmatprep.subr.mxu0 0.0
        %1067 = vmatpush2.msra.mxu0 0.0
        %1068 = vmatprep.subr.mxu0 0.0
        %1069 = vmatpush2.msra.mxu0 0.0
        %1070 = vmatprep.subr.mxu0 0.0
        %1071 = vmatpush2.msra.mxu0 0.0
        %1072 = vmatprep.subr.mxu0 0.0
        %1073 = vmatpush2.msra.mxu0 0.0
        %1074 = vmatprep.subr.mxu0 0.0
        %1075 = vmatpush2.msra.mxu0 0.0
        %1076 = vmatprep.subr.mxu0 0.0
        %1077 = vmatpush2.msra.mxu0 0.0
        %1078 = vmatprep.subr.mxu0 0.0
        %1079 = vmatpush2.msra.mxu0 0.0
        %1080 = vmatprep.subr.mxu0 0.0
        %1081 = vmatpush2.msra.mxu0 0.0
        %1082 = vmatprep.subr.mxu0 0.0
        %1083 = vmatpush2.msra.mxu0 0.0
        %1084 = vmatprep.subr.mxu0 0.0
        %1085 = vmatpush2.msra.mxu0 0.0
        %1086 = vmatprep.subr.mxu0 0.0
        %1087 = vmatpush2.msra.mxu0 0.0
        %1088 = vmatprep.mubr.f32.mxu0 0.0
        %1089 = vmatmul.mubr.f32.gmra.mxu0 %v1001
        %v1090 = vpop.f32.mrf.mxu0
        %v1091 = vadd.f32 %v963, %v1090
        %v1092 = vpop.f32.mrf.mxu0
        %v1093 = vadd.f32 %v963, %v1092
        %1094 = vmatprep.mubr.f32.mxu0 0.0
        %1095 = vmatmul.mubr.f32.gmra.mxu0 %v1004
        %v1096 = vpop.f32.mrf.mxu0
        %v1097 = vadd.f32 %v968, %v1096
        %v1098 = vpop.f32.mrf.mxu0
        %v1099 = vadd.f32 %v968, %v1098
        %1100 = vmatprep.mubr.f32.mxu0 0.0
        %1101 = vmatmul.mubr.f32.gmra.mxu0 %v1007
        %v1102 = vpop.f32.mrf.mxu0
        %v1103 = vadd.f32 %v973, %v1102
        %v1104 = vpop.f32.mrf.mxu0
        %v1105 = vadd.f32 %v973, %v1104
        %1106 = vmatprep.mubr.f32.mxu0 0.0
        %1107 = vmatmul.mubr.f32.gmra.mxu0 %v1010
        %v1108 = vpop.f32.mrf.mxu0
        %v1109 = vadd.f32 %v978, %v1108
        %v1110 = vpop.f32.mrf.mxu0
        %v1111 = vadd.f32 %v978, %v1110
        %1112 = vmatprep.mubr.f32.mxu0 0.0
        %1113 = vmatmul.mubr.f32.gmra.mxu0 %v1013
        %v1114 = vpop.f32.mrf.mxu0
        %v1115 = vadd.f32 %v983, %v1114
        %v1116 = vpop.f32.mrf.mxu0
        %v1117 = vadd.f32 %v983, %v1116
        %1118 = vmatprep.mubr.f32.mxu0 0.0
        %1119 = vmatmul.mubr.f32.gmra.mxu0 %v1016
        %v1120 = vpop.f32.mrf.mxu0
        %v1121 = vadd.f32 %v988, %v1120
        %v1122 = vpop.f32.mrf.mxu0
        %v1123 = vadd.f32 %v988, %v1122
        %1124 = vmatprep.mubr.f32.mxu0 0.0
        %1125 = vmatmul.mubr.f32.gmra.mxu0 %v1019
        %v1126 = vpop.f32.mrf.mxu0
        %v1127 = vadd.f32 %v993, %v1126
        %v1128 = vpop.f32.mrf.mxu0
        %v1129 = vadd.f32 %v993, %v1128
        %1130 = vmatprep.mubr.f32.mxu0 0.0
        %1131 = vmatmul.mubr.f32.gmra.mxu0 %v1022
        %v1132 = vpop.f32.mrf.mxu0
        %v1133 = vadd.f32 %v998, %v1132
        %v1134 = vpop.f32.mrf.mxu0
        %v1135 = vadd.f32 %v998, %v1134
        %1136 = vdwg.mxu0
        %s1137 = scalar_lea.vmem %s5, 8
        %v1138 = vld [vmem:[%s1137] sm:$0xff]
        %v1140 = vsel %vm527, %v1138, 0
        %1142 = vmatprep.subr.mxu0 0.0
        %1143 = vmatpush1.msra.mxu0 0.0
        %1144 = vmatprep.subr.mxu0 0.0
        %1145 = vmatpush1.msra.mxu0 0.0
        %1146 = vmatprep.subr.mxu0 0.0
        %1147 = vmatpush1.msra.mxu0 0.0
        %1148 = vmatprep.subr.mxu0 0.0
        %1149 = vmatpush1.msra.mxu0 0.0
        %1150 = vmatprep.subr.mxu0 0.0
        %1151 = vmatpush1.msra.mxu0 0.0
        %1152 = vmatprep.subr.mxu0 0.0
        %1153 = vmatpush1.msra.mxu0 0.0
        %1154 = vmatprep.subr.mxu0 0.0
        %1155 = vmatpush1.msra.mxu0 0.0
        %1156 = vmatprep.subr.mxu0 0.0
        %1157 = vmatpush1.msra.mxu0 0.0
        %1158 = vmatprep.subr.mxu0 %v1135
        %1159 = vmatpush1.msra.mxu0 %v1133
        %1160 = vmatprep.subr.mxu0 %v1129
        %1161 = vmatpush1.msra.mxu0 %v1127
        %1162 = vmatprep.subr.mxu0 %v1123
        %1163 = vmatpush1.msra.mxu0 %v1121
        %1164 = vmatprep.subr.mxu0 %v1117
        %1165 = vmatpush1.msra.mxu0 %v1115
        %1166 = vmatprep.subr.mxu0 %v1111
        %1167 = vmatpush1.msra.mxu0 %v1109
        %1168 = vmatprep.subr.mxu0 %v1105
        %1169 = vmatpush1.msra.mxu0 %v1103
        %1170 = vmatprep.subr.mxu0 %v1099
        %1171 = vmatpush1.msra.mxu0 %v1097
        %1172 = vmatprep.subr.mxu0 %v1093
        %1173 = vmatpush1.msra.mxu0 %v1091
        %1174 = vmatprep.subr.mxu0 0.0
        %1175 = vmatpush2.msra.mxu0 0.0
        %1176 = vmatprep.subr.mxu0 0.0
        %1177 = vmatpush2.msra.mxu0 0.0
        %1178 = vmatprep.subr.mxu0 0.0
        %1179 = vmatpush2.msra.mxu0 0.0
        %1180 = vmatprep.subr.mxu0 0.0
        %1181 = vmatpush2.msra.mxu0 0.0
        %1182 = vmatprep.subr.mxu0 0.0
        %1183 = vmatpush2.msra.mxu0 0.0
        %1184 = vmatprep.subr.mxu0 0.0
        %1185 = vmatpush2.msra.mxu0 0.0
        %1186 = vmatprep.subr.mxu0 0.0
        %1187 = vmatpush2.msra.mxu0 0.0
        %1188 = vmatprep.subr.mxu0 0.0
        %1189 = vmatpush2.msra.mxu0 0.0
        %1190 = vmatprep.subr.mxu0 0.0
        %1191 = vmatpush2.msra.mxu0 0.0
        %1192 = vmatprep.subr.mxu0 0.0
        %1193 = vmatpush2.msra.mxu0 0.0
        %1194 = vmatprep.subr.mxu0 0.0
        %1195 = vmatpush2.msra.mxu0 0.0
        %1196 = vmatprep.subr.mxu0 0.0
        %1197 = vmatpush2.msra.mxu0 0.0
        %1198 = vmatprep.subr.mxu0 0.0
        %1199 = vmatpush2.msra.mxu0 0.0
        %1200 = vmatprep.subr.mxu0 0.0
        %1201 = vmatpush2.msra.mxu0 0.0
        %1202 = vmatprep.subr.mxu0 0.0
        %1203 = vmatpush2.msra.mxu0 0.0
        %1204 = vmatprep.subr.mxu0 0.0
        %1205 = vmatpush2.msra.mxu0 0.0
        %1206 = vmatprep.mubr.f32.mxu0 0.0
        %1207 = vmatmul.mubr.f32.gmra.mxu0 %v1140
        %v1208 = vpop.f32.mrf.mxu0
        %v1209 = vadd.f32 0.0, %v1208
        %v1210 = vpop.f32.mrf.mxu0
        %v1211 = vadd.f32 0.0, %v1210
        %1212 = vdwg.mxu0
        %v1213 = vlaneseq
        %v1214 = vshrl.u32 %v1213, 7
        %v1215 = vsub.s32 0, %v1214
        %v1216 = vrot.slane %v1209, %v1215
        %v1217 = vlaneseq
        %v1218 = vshrl.u32 %v1217, 7
        %v1219 = vsub.s32 0, %v1218
        %v1220 = vrot.slane %v1211, %v1219
        %v1221 = vsub.f32 %v1091, %v1216
        %v1222 = vsub.f32 %v1093, %v1220
        %v1223 = vsub.f32 %v1097, %v1216
        %v1224 = vsub.f32 %v1099, %v1220
        %v1225 = vsub.f32 %v1103, %v1216
        %v1226 = vsub.f32 %v1105, %v1220
        %v1227 = vsub.f32 %v1109, %v1216
        %v1228 = vsub.f32 %v1111, %v1220
        %v1229 = vsub.f32 %v1115, %v1216
        %v1230 = vsub.f32 %v1117, %v1220
        %v1231 = vsub.f32 %v1121, %v1216
        %v1232 = vsub.f32 %v1123, %v1220
        %v1233 = vsub.f32 %v1127, %v1216
        %v1234 = vsub.f32 %v1129, %v1220
        %v1235 = vsub.f32 %v1133, %v1216
        %v1236 = vsub.f32 %v1135, %v1220
        %v1237 = vmul.f32 %v1221, %v1221
        %v1238 = vmul.f32 %v1222, %v1222
        %v1239 = vmul.f32 %v1223, %v1223
        %v1240 = vmul.f32 %v1224, %v1224
        %v1241 = vmul.f32 %v1225, %v1225
        %v1242 = vmul.f32 %v1226, %v1226
        %v1243 = vmul.f32 %v1227, %v1227
        %v1244 = vmul.f32 %v1228, %v1228
        %v1245 = vmul.f32 %v1229, %v1229
        %v1246 = vmul.f32 %v1230, %v1230
        %v1247 = vmul.f32 %v1231, %v1231
        %v1248 = vmul.f32 %v1232, %v1232
        %v1249 = vmul.f32 %v1233, %v1233
        %v1250 = vmul.f32 %v1234, %v1234
        %v1251 = vmul.f32 %v1235, %v1235
        %v1252 = vmul.f32 %v1236, %v1236
        %1253 = vmatprep.subr.mxu0 0.0
        %1254 = vmatpush1.msra.mxu0 0.0
        %1255 = vmatprep.subr.mxu0 0.0
        %1256 = vmatpush1.msra.mxu0 0.0
        %1257 = vmatprep.subr.mxu0 0.0
        %1258 = vmatpush1.msra.mxu0 0.0
        %1259 = vmatprep.subr.mxu0 0.0
        %1260 = vmatpush1.msra.mxu0 0.0
        %1261 = vmatprep.subr.mxu0 0.0
        %1262 = vmatpush1.msra.mxu0 0.0
        %1263 = vmatprep.subr.mxu0 0.0
        %1264 = vmatpush1.msra.mxu0 0.0
        %1265 = vmatprep.subr.mxu0 0.0
        %1266 = vmatpush1.msra.mxu0 0.0
        %1267 = vmatprep.subr.mxu0 0.0
        %1268 = vmatpush1.msra.mxu0 0.0
        %1269 = vmatprep.subr.mxu0 %v1252
        %1270 = vmatpush1.msra.mxu0 %v1251
        %1271 = vmatprep.subr.mxu0 %v1250
        %1272 = vmatpush1.msra.mxu0 %v1249
        %1273 = vmatprep.subr.mxu0 %v1248
        %1274 = vmatpush1.msra.mxu0 %v1247
        %1275 = vmatprep.subr.mxu0 %v1246
        %1276 = vmatpush1.msra.mxu0 %v1245
        %1277 = vmatprep.subr.mxu0 %v1244
        %1278 = vmatpush1.msra.mxu0 %v1243
        %1279 = vmatprep.subr.mxu0 %v1242
        %1280 = vmatpush1.msra.mxu0 %v1241
        %1281 = vmatprep.subr.mxu0 %v1240
        %1282 = vmatpush1.msra.mxu0 %v1239
        %1283 = vmatprep.subr.mxu0 %v1238
        %1284 = vmatpush1.msra.mxu0 %v1237
        %1285 = vmatprep.subr.mxu0 0.0
        %1286 = vmatpush2.msra.mxu0 0.0
        %1287 = vmatprep.subr.mxu0 0.0
        %1288 = vmatpush2.msra.mxu0 0.0
        %1289 = vmatprep.subr.mxu0 0.0
        %1290 = vmatpush2.msra.mxu0 0.0
        %1291 = vmatprep.subr.mxu0 0.0
        %1292 = vmatpush2.msra.mxu0 0.0
        %1293 = vmatprep.subr.mxu0 0.0
        %1294 = vmatpush2.msra.mxu0 0.0
        %1295 = vmatprep.subr.mxu0 0.0
        %1296 = vmatpush2.msra.mxu0 0.0
        %1297 = vmatprep.subr.mxu0 0.0
        %1298 = vmatpush2.msra.mxu0 0.0
        %1299 = vmatprep.subr.mxu0 0.0
        %1300 = vmatpush2.msra.mxu0 0.0
        %1301 = vmatprep.subr.mxu0 0.0
        %1302 = vmatpush2.msra.mxu0 0.0
        %1303 = vmatprep.subr.mxu0 0.0
        %1304 = vmatpush2.msra.mxu0 0.0
        %1305 = vmatprep.subr.mxu0 0.0
        %1306 = vmatpush2.msra.mxu0 0.0
        %1307 = vmatprep.subr.mxu0 0.0
        %1308 = vmatpush2.msra.mxu0 0.0
        %1309 = vmatprep.subr.mxu0 0.0
        %1310 = vmatpush2.msra.mxu0 0.0
        %1311 = vmatprep.subr.mxu0 0.0
        %1312 = vmatpush2.msra.mxu0 0.0
        %1313 = vmatprep.subr.mxu0 0.0
        %1314 = vmatpush2.msra.mxu0 0.0
        %1315 = vmatprep.subr.mxu0 0.0
        %1316 = vmatpush2.msra.mxu0 0.0
        %1317 = vmatprep.mubr.f32.mxu0 0.0
        %1318 = vmatmul.mubr.f32.gmra.mxu0 %v1140
        %v1319 = vpop.f32.mrf.mxu0
        %v1320 = vadd.f32 0.0, %v1319
        %v1321 = vpop.f32.mrf.mxu0
        %v1322 = vadd.f32 0.0, %v1321
        %1323 = vdwg.mxu0
        %v1324 = vadd.f32 %v1320, 1e-05
        %v1325 = vadd.f32 %v1322, 1e-05
        %v1326 = vrsqrt.pop %v1324
        %v1327 = vrsqrt.pop %v1325
        %1328 = vset.pattern.permute.xlu0 1
        %1329 = vperm.xlu0 %1328, %v952
        %v1330 = vpop.permute.xlu0 %1329
        %1332 = vset.pattern.permute.xlu0 1
        %1333 = vperm.xlu0 %1332, %v953
        %v1334 = vpop.permute.xlu0 %1333
        %1336 = vset.pattern.permute.xlu0 1
        %1337 = vperm.xlu0 %1336, %v954
        %v1338 = vpop.permute.xlu0 %1337
        %1340 = vset.pattern.permute.xlu0 1
        %1341 = vperm.xlu0 %1340, %v955
        %v1342 = vpop.permute.xlu0 %1341
        %1344 = vset.pattern.permute.xlu0 1
        %1345 = vperm.xlu0 %1344, %v956
        %v1346 = vpop.permute.xlu0 %1345
        %1348 = vset.pattern.permute.xlu0 1
        %1349 = vperm.xlu0 %1348, %v957
        %v1350 = vpop.permute.xlu0 %1349
        %1352 = vset.pattern.permute.xlu0 1
        %1353 = vperm.xlu0 %1352, %v958
        %v1354 = vpop.permute.xlu0 %1353
        %1356 = vset.pattern.permute.xlu0 1
        %1357 = vperm.xlu0 %1356, %v959
        %v1358 = vpop.permute.xlu0 %1357
        %v1360 = vmul.f32 %v1221, %v1330
        %v1361 = vmul.f32 %v1222, %v1330
        %v1362 = vmul.f32 %v1223, %v1334
        %v1363 = vmul.f32 %v1224, %v1334
        %v1364 = vmul.f32 %v1225, %v1338
        %v1365 = vmul.f32 %v1226, %v1338
        %v1366 = vmul.f32 %v1227, %v1342
        %v1367 = vmul.f32 %v1228, %v1342
        %v1368 = vmul.f32 %v1229, %v1346
        %v1369 = vmul.f32 %v1230, %v1346
        %v1370 = vmul.f32 %v1231, %v1350
        %v1371 = vmul.f32 %v1232, %v1350
        %v1372 = vmul.f32 %v1233, %v1354
        %v1373 = vmul.f32 %v1234, %v1354
        %v1374 = vmul.f32 %v1235, %v1358
        %v1375 = vmul.f32 %v1236, %v1358
        %v1376 = vlaneseq
        %v1377 = vshrl.u32 %v1376, 7
        %v1378 = vsub.s32 0, %v1377
        %v1379 = vrot.slane %v1326, %v1378
        %v1380 = vlaneseq
        %v1381 = vshrl.u32 %v1380, 7
        %v1382 = vsub.s32 0, %v1381
        %v1383 = vrot.slane %v1327, %v1382
        %v1384 = vmul.f32 %v1360, %v1379
        %v1385 = vmul.f32 %v1361, %v1383
        %v1386 = vmul.f32 %v1362, %v1379
        %v1387 = vmul.f32 %v1363, %v1383
        %v1388 = vmul.f32 %v1364, %v1379
        %v1389 = vmul.f32 %v1365, %v1383
        %v1390 = vmul.f32 %v1366, %v1379
        %v1391 = vmul.f32 %v1367, %v1383
        %v1392 = vmul.f32 %v1368, %v1379
        %v1393 = vmul.f32 %v1369, %v1383
        %v1394 = vmul.f32 %v1370, %v1379
        %v1395 = vmul.f32 %v1371, %v1383
        %v1396 = vmul.f32 %v1372, %v1379
        %v1397 = vmul.f32 %v1373, %v1383
        %v1398 = vmul.f32 %v1374, %v1379
        %v1399 = vmul.f32 %v1375, %v1383
        %1400 = vset.pattern.permute.xlu0 2
        %1401 = vperm.xlu0 %1400, %v952
        %v1402 = vpop.permute.xlu0 %1401
        %1404 = vset.pattern.permute.xlu0 2
        %1405 = vperm.xlu0 %1404, %v953
        %v1406 = vpop.permute.xlu0 %1405
        %1408 = vset.pattern.permute.xlu0 2
        %1409 = vperm.xlu0 %1408, %v954
        %v1410 = vpop.permute.xlu0 %1409
        %1412 = vset.pattern.permute.xlu0 2
        %1413 = vperm.xlu0 %1412, %v955
        %v1414 = vpop.permute.xlu0 %1413
        %1416 = vset.pattern.permute.xlu0 2
        %1417 = vperm.xlu0 %1416, %v956
        %v1418 = vpop.permute.xlu0 %1417
        %1420 = vset.pattern.permute.xlu0 2
        %1421 = vperm.xlu0 %1420, %v957
        %v1422 = vpop.permute.xlu0 %1421
        %1424 = vset.pattern.permute.xlu0 2
        %1425 = vperm.xlu0 %1424, %v958
        %v1426 = vpop.permute.xlu0 %1425
        %1428 = vset.pattern.permute.xlu0 2
        %1429 = vperm.xlu0 %1428, %v959
        %v1430 = vpop.permute.xlu0 %1429
        %v1432 = vadd.f32 %v1384, %v1402
        %v1433 = vadd.f32 %v1385, %v1402
        %v1434 = vadd.f32 %v1386, %v1406
        %v1435 = vadd.f32 %v1387, %v1406
        %v1436 = vadd.f32 %v1388, %v1410
        %v1437 = vadd.f32 %v1389, %v1410
        %v1438 = vadd.f32 %v1390, %v1414
        %v1439 = vadd.f32 %v1391, %v1414
        %v1440 = vadd.f32 %v1392, %v1418
        %v1441 = vadd.f32 %v1393, %v1418
        %v1442 = vadd.f32 %v1394, %v1422
        %v1443 = vadd.f32 %v1395, %v1422
        %v1444 = vadd.f32 %v1396, %v1426
        %v1445 = vadd.f32 %v1397, %v1426
        %v1446 = vadd.f32 %v1398, %v1430
        %v1447 = vadd.f32 %v1399, %v1430
        %v1448 = vmax.f32 %v1432, 0.0
        %v1449 = vmax.f32 %v1433, 0.0
        %v1450 = vmax.f32 %v1434, 0.0
        %v1451 = vmax.f32 %v1435, 0.0
        %v1452 = vmax.f32 %v1436, 0.0
        %v1453 = vmax.f32 %v1437, 0.0
        %v1454 = vmax.f32 %v1438, 0.0
        %v1455 = vmax.f32 %v1439, 0.0
        %v1456 = vmax.f32 %v1440, 0.0
        %v1457 = vmax.f32 %v1441, 0.0
        %v1458 = vmax.f32 %v1442, 0.0
        %v1459 = vmax.f32 %v1443, 0.0
        %v1460 = vmax.f32 %v1444, 0.0
        %v1461 = vmax.f32 %v1445, 0.0
        %v1462 = vmax.f32 %v1446, 0.0
        %v1463 = vmax.f32 %v1447, 0.0
        %1464 = vmatprep.subr.mxu0 0.0
        %1465 = vmatpush1.msra.mxu0 0.0
        %1466 = vmatprep.subr.mxu0 0.0
        %1467 = vmatpush1.msra.mxu0 0.0
        %1468 = vmatprep.subr.mxu0 0.0
        %1469 = vmatpush1.msra.mxu0 0.0
        %1470 = vmatprep.subr.mxu0 0.0
        %1471 = vmatpush1.msra.mxu0 0.0
        %1472 = vmatprep.subr.mxu0 0.0
        %1473 = vmatpush1.msra.mxu0 0.0
        %1474 = vmatprep.subr.mxu0 0.0
        %1475 = vmatpush1.msra.mxu0 0.0
        %1476 = vmatprep.subr.mxu0 0.0
        %1477 = vmatpush1.msra.mxu0 0.0
        %1478 = vmatprep.subr.mxu0 0.0
        %1479 = vmatpush1.msra.mxu0 0.0
        %1480 = vmatprep.subr.mxu0 %v1463
        %1481 = vmatpush1.msra.mxu0 %v1462
        %1482 = vmatprep.subr.mxu0 %v1461
        %1483 = vmatpush1.msra.mxu0 %v1460
        %1484 = vmatprep.subr.mxu0 %v1459
        %1485 = vmatpush1.msra.mxu0 %v1458
        %1486 = vmatprep.subr.mxu0 %v1457
        %1487 = vmatpush1.msra.mxu0 %v1456
        %1488 = vmatprep.subr.mxu0 %v1455
        %1489 = vmatpush1.msra.mxu0 %v1454
        %1490 = vmatprep.subr.mxu0 %v1453
        %1491 = vmatpush1.msra.mxu0 %v1452
        %1492 = vmatprep.subr.mxu0 %v1451
        %1493 = vmatpush1.msra.mxu0 %v1450
        %1494 = vmatprep.subr.mxu0 %v1449
        %1495 = vmatpush1.msra.mxu0 %v1448
        %1496 = vmatprep.subr.mxu0 0.0
        %1497 = vmatpush2.msra.mxu0 0.0
        %1498 = vmatprep.subr.mxu0 0.0
        %1499 = vmatpush2.msra.mxu0 0.0
        %1500 = vmatprep.subr.mxu0 0.0
        %1501 = vmatpush2.msra.mxu0 0.0
        %1502 = vmatprep.subr.mxu0 0.0
        %1503 = vmatpush2.msra.mxu0 0.0
        %1504 = vmatprep.subr.mxu0 0.0
        %1505 = vmatpush2.msra.mxu0 0.0
        %1506 = vmatprep.subr.mxu0 0.0
        %1507 = vmatpush2.msra.mxu0 0.0
        %1508 = vmatprep.subr.mxu0 0.0
        %1509 = vmatpush2.msra.mxu0 0.0
        %1510 = vmatprep.subr.mxu0 0.0
        %1511 = vmatpush2.msra.mxu0 0.0
        %1512 = vmatprep.subr.mxu0 0.0
        %1513 = vmatpush2.msra.mxu0 0.0
        %1514 = vmatprep.subr.mxu0 0.0
        %1515 = vmatpush2.msra.mxu0 0.0
        %1516 = vmatprep.subr.mxu0 0.0
        %1517 = vmatpush2.msra.mxu0 0.0
        %1518 = vmatprep.subr.mxu0 0.0
        %1519 = vmatpush2.msra.mxu0 0.0
        %1520 = vmatprep.subr.mxu0 0.0
        %1521 = vmatpush2.msra.mxu0 0.0
        %1522 = vmatprep.subr.mxu0 0.0
        %1523 = vmatpush2.msra.mxu0 0.0
        %1524 = vmatprep.subr.mxu0 0.0
        %1525 = vmatpush2.msra.mxu0 0.0
        %1526 = vmatprep.subr.mxu0 0.0
        %1527 = vmatpush2.msra.mxu0 0.0
        %1528 = vmatprep.mubr.f32.mxu0 0.0
        %1529 = vmatmul.mubr.f32.gmra.mxu0 %v1140
        %v1530 = vpop.f32.mrf.mxu0
        %v1531 = vadd.f32 0.0, %v1530
        %v1532 = vpop.f32.mrf.mxu0
        %v1533 = vadd.f32 0.0, %v1532
        %1534 = vdwg.mxu0
        %v1535 = vstv %s941
        %v1536 = vadd.f32 %v1531, %v1535
        %v1537 = vadd.f32 %v1533, %v1535
        %v1538 = vxor.u32 %v1536, 2147483648
        %v1539 = vxor.u32 %v1537, 2147483648
        %v1540 = vmul.f32 %v1538, 1.442695
        %v1541 = vpow.pop %v1540
        %v1542 = vmul.f32 %v1539, 1.442695
        %v1543 = vpow.pop %v1542
        %v1544 = vadd.f32 %v1541, 1.0
        %v1545 = vadd.f32 %v1543, 1.0
        %v1546 = vrcp.pop %v1544
        %v1547 = vmul.f32 1.0, %v1546
        %v1548 = vrcp.pop %v1545
        %v1549 = vmul.f32 1.0, %v1548
        %s1550 = sld [smem:[#allocation2 + $0x2]]
        %v1551 = vstv %s1550
        %v1552 = vmul.f32 %v936, %v1551
        %v1553 = vmul.f32 %v938, %v1551
        %s1554 = sld [smem:[#allocation2 + $0x3]]
        %v1555 = vstv %s1554
        %v1556 = vmul.f32 %v1547, %v1555
        %v1557 = vmul.f32 %v1549, %v1555
        %v1558 = vadd.f32 %v1552, %v1556
        %v1559 = vadd.f32 %v1553, %v1557
        %s1560 = sld [smem:[#allocation2 + $0x4]]
        %v1561 = vstv %s1560
        %v1562 = vadd.f32 %v1558, %v1561
        %v1563 = vadd.f32 %v1559, %v1561
        %v1566 = vcombine.low %v1562, %v1563
        %v1568 = vunpack.c.l.s4 1966171168
        %v1569 = vunpack.c.0.s8 %v1568
        %v1570 = vlaneseq
        %v1571 = vshrl.u32 %v1570, 7
        %v1572 = vsub.s32 %v1569, %v1571
        %v1573 = vrot.slane %v1566, %v1572
        %v1574 = vcombine.high %v1573, %v1573
        %v1576 = vunpack.c.l.s4 1966171168
        %v1577 = vunpack.c.0.s8 %v1576
        %v1578 = vlaneseq
        %v1579 = vshrl.u32 %v1578, 7
        %v1580 = vsub.s32 %v1577, %v1579
        %v1581 = vrot.slane %v1574, %v1580
        %v1583 = vlaneseq
        %vm1584 = vcmp.ge.s32.totalorder %v1583, 0
        %vm1585 = vcmp.lt.s32.totalorder %v1583, 256
        %vm1586 = vmand %vm1584, %vm1585
        %1587 = vst.msk [vmem:[%s295] sm:$0x3] %vm1586, %v1581
        %s1588 = sand.u32 %s162, 1
        %s1589 = sand.u32 %s162, 1
        %s1590 = smul.addr %s1589, 2
        %s1591 = scalar_lea.vmem [#allocation4], %s1590
        // Predicated region
        $region49: #{velocity_model_nam.1} parent=43 // pred_check
          %p1592 = pneg %p172
        $region50: #{velocity_model_nam.1} parent=43 // pred_check_branch
          %1594 = sbr.rel (%p1592) target = $region52
        $region51: #{velocity_model_nam.1} parent=43 // pred_region
          %s1595 = smul.u32 2, %s18
          %s1596 = ssub.s32 3, %s1595
          %p1597 = scmp.lt.s32.totalorder %s1596, 2
          %s1598 = scalar_select %p1597, %s1596, 2
          %s1599 = smul.u32 16, %s1598
          %p1600 = scmp.ne.s32.totalorder 0, %s1599
          %s1601 = scalar_lea.vmem %s6, %s1595
          // Predicated region
          $region53: #{velocity_model_nam.1} parent=51 // pred_check
            %p1602 = pneg %p1600
          $region54: #{velocity_model_nam.1} parent=51 // pred_check_branch
            %1604 = sbr.rel (%p1602) target = $region56
          $region55: #{velocity_model_nam.1} parent=51 // pred_region
            %p1605 = scmp.lt.u32.totalorder %s1598, 8
            %p1606 = pneg %p1605
            // Predicated region
            $region57: #{velocity_model_nam.1} parent=55 // pred_check
              _
            $region58: #{velocity_model_nam.1} parent=55 // pred_check_branch
              %1608 = sbr.rel (%p1605) target = $region60
            $region59: #{velocity_model_nam.1} parent=55 // pred_region
              %s1624 = sand.u32 %s1598, 7
              %p1625 = scmp.eq.s32.totalorder %s1624, 0
              // Predicated region
              $region72: #{velocity_model_nam.1} parent=59 // pred_check
                %p1626 = pneg %p1625
              $region73: #{velocity_model_nam.1} parent=59 // pred_check_branch
                %1628 = sbr.rel (%p1626) target = $region75
              $region74: #{velocity_model_nam.1} parent=59 // pred_region
                %s1629 = sshrl.u32 %s1598, 3
                %s1630 = sshrl.u32 %s1629, 6
                // While loop
                $region76: #{velocity_model_nam.1} parent=74 // loop_pre_header
                  _
                $region77: #{velocity_model_nam.1} parent=74 // loop_header
                  %s1634 = sphi 0, %s1636
                  %p1635 = scmp.ge.s32.totalorder %s1634, %s1630
                  %s1639 = sphi 0, %s1772
                  %s1640 = sphi %s1591, %s1775
                  %s1641 = sphi %s1601, %s1776
                $region78: #{velocity_model_nam.1} parent=74 // loop_header_branch
                  %1638 = sbr.rel (%p1635) target = $region82
                $region79: #{velocity_model_nam.1} parent=74 // loop_body
                  %v1642 = vld [vmem:[%s1640] sm:$0xff]
                  %1643 = vst [vmem:[%s1641] sm:$0xff] %v1642
                  %v1644 = vld [vmem:[%s1640 + $0x8] sm:$0xff]
                  %1645 = vst [vmem:[%s1641 + $0x8] sm:$0xff] %v1644
                  %v1646 = vld [vmem:[%s1640 + $0x10] sm:$0xff]
                  %1647 = vst [vmem:[%s1641 + $0x10] sm:$0xff] %v1646
                  %v1648 = vld [vmem:[%s1640 + $0x18] sm:$0xff]
                  %1649 = vst [vmem:[%s1641 + $0x18] sm:$0xff] %v1648
                  %v1650 = vld [vmem:[%s1640 + $0x20] sm:$0xff]
                  %1651 = vst [vmem:[%s1641 + $0x20] sm:$0xff] %v1650
                  %v1652 = vld [vmem:[%s1640 + $0x28] sm:$0xff]
                  %1653 = vst [vmem:[%s1641 + $0x28] sm:$0xff] %v1652
                  %v1654 = vld [vmem:[%s1640 + $0x30] sm:$0xff]
                  %1655 = vst [vmem:[%s1641 + $0x30] sm:$0xff] %v1654
                  %v1656 = vld [vmem:[%s1640 + $0x38] sm:$0xff]
                  %1657 = vst [vmem:[%s1641 + $0x38] sm:$0xff] %v1656
                  %v1658 = vld [vmem:[%s1640 + $0x40] sm:$0xff]
                  %1659 = vst [vmem:[%s1641 + $0x40] sm:$0xff] %v1658
                  %v1660 = vld [vmem:[%s1640 + $0x48] sm:$0xff]
                  %1661 = vst [vmem:[%s1641 + $0x48] sm:$0xff] %v1660
                  %v1662 = vld [vmem:[%s1640 + $0x50] sm:$0xff]
                  %1663 = vst [vmem:[%s1641 + $0x50] sm:$0xff] %v1662
                  %v1664 = vld [vmem:[%s1640 + $0x58] sm:$0xff]
                  %1665 = vst [vmem:[%s1641 + $0x58] sm:$0xff] %v1664
                  %v1666 = vld [vmem:[%s1640 + $0x60] sm:$0xff]
                  %1667 = vst [vmem:[%s1641 + $0x60] sm:$0xff] %v1666
                  %v1668 = vld [vmem:[%s1640 + $0x68] sm:$0xff]
                  %1669 = vst [vmem:[%s1641 + $0x68] sm:$0xff] %v1668
                  %v1670 = vld [vmem:[%s1640 + $0x70] sm:$0xff]
                  %1671 = vst [vmem:[%s1641 + $0x70] sm:$0xff] %v1670
                  %v1672 = vld [vmem:[%s1640 + $0x78] sm:$0xff]
                  %1673 = vst [vmem:[%s1641 + $0x78] sm:$0xff] %v1672
                  %v1674 = vld [vmem:[%s1640 + $0x80] sm:$0xff]
                  %1675 = vst [vmem:[%s1641 + $0x80] sm:$0xff] %v1674
                  %v1676 = vld [vmem:[%s1640 + $0x88] sm:$0xff]
                  %1677 = vst [vmem:[%s1641 + $0x88] sm:$0xff] %v1676
                  %v1678 = vld [vmem:[%s1640 + $0x90] sm:$0xff]
                  %1679 = vst [vmem:[%s1641 + $0x90] sm:$0xff] %v1678
                  %v1680 = vld [vmem:[%s1640 + $0x98] sm:$0xff]
                  %1681 = vst [vmem:[%s1641 + $0x98] sm:$0xff] %v1680
                  %v1682 = vld [vmem:[%s1640 + $0xa0] sm:$0xff]
                  %1683 = vst [vmem:[%s1641 + $0xa0] sm:$0xff] %v1682
                  %v1684 = vld [vmem:[%s1640 + $0xa8] sm:$0xff]
                  %1685 = vst [vmem:[%s1641 + $0xa8] sm:$0xff] %v1684
                  %v1686 = vld [vmem:[%s1640 + $0xb0] sm:$0xff]
                  %1687 = vst [vmem:[%s1641 + $0xb0] sm:$0xff] %v1686
                  %v1688 = vld [vmem:[%s1640 + $0xb8] sm:$0xff]
                  %1689 = vst [vmem:[%s1641 + $0xb8] sm:$0xff] %v1688
                  %v1690 = vld [vmem:[%s1640 + $0xc0] sm:$0xff]
                  %1691 = vst [vmem:[%s1641 + $0xc0] sm:$0xff] %v1690
                  %v1692 = vld [vmem:[%s1640 + $0xc8] sm:$0xff]
                  %1693 = vst [vmem:[%s1641 + $0xc8] sm:$0xff] %v1692
                  %v1694 = vld [vmem:[%s1640 + $0xd0] sm:$0xff]
                  %1695 = vst [vmem:[%s1641 + $0xd0] sm:$0xff] %v1694
                  %v1696 = vld [vmem:[%s1640 + $0xd8] sm:$0xff]
                  %1697 = vst [vmem:[%s1641 + $0xd8] sm:$0xff] %v1696
                  %v1698 = vld [vmem:[%s1640 + $0xe0] sm:$0xff]
                  %1699 = vst [vmem:[%s1641 + $0xe0] sm:$0xff] %v1698
                  %v1700 = vld [vmem:[%s1640 + $0xe8] sm:$0xff]
                  %1701 = vst [vmem:[%s1641 + $0xe8] sm:$0xff] %v1700
                  %v1702 = vld [vmem:[%s1640 + $0xf0] sm:$0xff]
                  %1703 = vst [vmem:[%s1641 + $0xf0] sm:$0xff] %v1702
                  %v1704 = vld [vmem:[%s1640 + $0xf8] sm:$0xff]
                  %1705 = vst [vmem:[%s1641 + $0xf8] sm:$0xff] %v1704
                  %v1706 = vld [vmem:[%s1640 + $0x100] sm:$0xff]
                  %1707 = vst [vmem:[%s1641 + $0x100] sm:$0xff] %v1706
                  %v1708 = vld [vmem:[%s1640 + $0x108] sm:$0xff]
                  %1709 = vst [vmem:[%s1641 + $0x108] sm:$0xff] %v1708
                  %v1710 = vld [vmem:[%s1640 + $0x110] sm:$0xff]
                  %1711 = vst [vmem:[%s1641 + $0x110] sm:$0xff] %v1710
                  %v1712 = vld [vmem:[%s1640 + $0x118] sm:$0xff]
                  %1713 = vst [vmem:[%s1641 + $0x118] sm:$0xff] %v1712
                  %v1714 = vld [vmem:[%s1640 + $0x120] sm:$0xff]
                  %1715 = vst [vmem:[%s1641 + $0x120] sm:$0xff] %v1714
                  %v1716 = vld [vmem:[%s1640 + $0x128] sm:$0xff]
                  %1717 = vst [vmem:[%s1641 + $0x128] sm:$0xff] %v1716
                  %v1718 = vld [vmem:[%s1640 + $0x130] sm:$0xff]
                  %1719 = vst [vmem:[%s1641 + $0x130] sm:$0xff] %v1718
                  %v1720 = vld [vmem:[%s1640 + $0x138] sm:$0xff]
                  %1721 = vst [vmem:[%s1641 + $0x138] sm:$0xff] %v1720
                  %v1722 = vld [vmem:[%s1640 + $0x140] sm:$0xff]
                  %1723 = vst [vmem:[%s1641 + $0x140] sm:$0xff] %v1722
                  %v1724 = vld [vmem:[%s1640 + $0x148] sm:$0xff]
                  %1725 = vst [vmem:[%s1641 + $0x148] sm:$0xff] %v1724
                  %v1726 = vld [vmem:[%s1640 + $0x150] sm:$0xff]
                  %1727 = vst [vmem:[%s1641 + $0x150] sm:$0xff] %v1726
                  %v1728 = vld [vmem:[%s1640 + $0x158] sm:$0xff]
                  %1729 = vst [vmem:[%s1641 + $0x158] sm:$0xff] %v1728
                  %v1730 = vld [vmem:[%s1640 + $0x160] sm:$0xff]
                  %1731 = vst [vmem:[%s1641 + $0x160] sm:$0xff] %v1730
                  %v1732 = vld [vmem:[%s1640 + $0x168] sm:$0xff]
                  %1733 = vst [vmem:[%s1641 + $0x168] sm:$0xff] %v1732
                  %v1734 = vld [vmem:[%s1640 + $0x170] sm:$0xff]
                  %1735 = vst [vmem:[%s1641 + $0x170] sm:$0xff] %v1734
                  %v1736 = vld [vmem:[%s1640 + $0x178] sm:$0xff]
                  %1737 = vst [vmem:[%s1641 + $0x178] sm:$0xff] %v1736
                  %v1738 = vld [vmem:[%s1640 + $0x180] sm:$0xff]
                  %1739 = vst [vmem:[%s1641 + $0x180] sm:$0xff] %v1738
                  %v1740 = vld [vmem:[%s1640 + $0x188] sm:$0xff]
                  %1741 = vst [vmem:[%s1641 + $0x188] sm:$0xff] %v1740
                  %v1742 = vld [vmem:[%s1640 + $0x190] sm:$0xff]
                  %1743 = vst [vmem:[%s1641 + $0x190] sm:$0xff] %v1742
                  %v1744 = vld [vmem:[%s1640 + $0x198] sm:$0xff]
                  %1745 = vst [vmem:[%s1641 + $0x198] sm:$0xff] %v1744
                  %v1746 = vld [vmem:[%s1640 + $0x1a0] sm:$0xff]
                  %1747 = vst [vmem:[%s1641 + $0x1a0] sm:$0xff] %v1746
                  %v1748 = vld [vmem:[%s1640 + $0x1a8] sm:$0xff]
                  %1749 = vst [vmem:[%s1641 + $0x1a8] sm:$0xff] %v1748
                  %v1750 = vld [vmem:[%s1640 + $0x1b0] sm:$0xff]
                  %1751 = vst [vmem:[%s1641 + $0x1b0] sm:$0xff] %v1750
                  %v1752 = vld [vmem:[%s1640 + $0x1b8] sm:$0xff]
                  %1753 = vst [vmem:[%s1641 + $0x1b8] sm:$0xff] %v1752
                  %v1754 = vld [vmem:[%s1640 + $0x1c0] sm:$0xff]
                  %1755 = vst [vmem:[%s1641 + $0x1c0] sm:$0xff] %v1754
                  %v1756 = vld [vmem:[%s1640 + $0x1c8] sm:$0xff]
                  %1757 = vst [vmem:[%s1641 + $0x1c8] sm:$0xff] %v1756
                  %v1758 = vld [vmem:[%s1640 + $0x1d0] sm:$0xff]
                  %1759 = vst [vmem:[%s1641 + $0x1d0] sm:$0xff] %v1758
                  %v1760 = vld [vmem:[%s1640 + $0x1d8] sm:$0xff]
                  %1761 = vst [vmem:[%s1641 + $0x1d8] sm:$0xff] %v1760
                  %v1762 = vld [vmem:[%s1640 + $0x1e0] sm:$0xff]
                  %1763 = vst [vmem:[%s1641 + $0x1e0] sm:$0xff] %v1762
                  %v1764 = vld [vmem:[%s1640 + $0x1e8] sm:$0xff]
                  %1765 = vst [vmem:[%s1641 + $0x1e8] sm:$0xff] %v1764
                  %v1766 = vld [vmem:[%s1640 + $0x1f0] sm:$0xff]
                  %1767 = vst [vmem:[%s1641 + $0x1f0] sm:$0xff] %v1766
                  %v1768 = vld [vmem:[%s1640 + $0x1f8] sm:$0xff]
                  %1769 = vst [vmem:[%s1641 + $0x1f8] sm:$0xff] %v1768
                  %s1770 = sadd.s32 1, %s1639
                  %p1771 = scmp.ge.s32.totalorder %s1770, %s1630
                  %s1772 = scalar_select %p1771, 0, %s1770
                  %s1773 = smul.u32 %s1772, 512
                  %s1774 = smul.u32 %s1772, 512
                  %s1775 = scalar_lea.vmem %s1591, %s1773 [#allocation4]
                  %s1776 = scalar_lea.vmem %s1601, %s1774
                $region80: #{velocity_model_nam.1} parent=74 // loop_footer
                  %s1636 = sadd.s32 %s1634, 1
                $region81: #{velocity_model_nam.1} parent=74 // loop_footer_branch
                  %1633 = sbr.rel target = $region77
                $region82: #{velocity_model_nam.1} parent=74 // loop_exit
                  _
                %s1777 = sshrl.u32 %s1629, 6
                %s1778 = sand.u32 %s1629, 63
                %s1779 = smul.u32 %s1777, 64
                %s1780 = smul.u32 128, %s1779
                %s1781 = sshra.s32 %s1780, 4
                %s1782 = scalar_lea.vmem %s1591, %s1781 [#allocation4]
                %s1783 = smul.u32 128, %s1779
                %s1784 = sshra.s32 %s1783, 4
                %s1785 = scalar_lea.vmem %s1601, %s1784
                // While loop
                $region83: #{velocity_model_nam.1} parent=74 // loop_pre_header
                  _
                $region84: #{velocity_model_nam.1} parent=74 // loop_header
                  %s1789 = sphi 0, %s1791
                  %p1790 = scmp.ge.s32.totalorder %s1789, %s1778
                  %s1794 = sphi 0, %s1801
                  %s1795 = sphi %s1782, %s1804
                  %s1796 = sphi %s1785, %s1805
                $region85: #{velocity_model_nam.1} parent=74 // loop_header_branch
                  %1793 = sbr.rel (%p1790) target = $region89
                $region86: #{velocity_model_nam.1} parent=74 // loop_body
                  %v1797 = vld [vmem:[%s1795] sm:$0xff]
                  %1798 = vst [vmem:[%s1796] sm:$0xff] %v1797
                  %s1799 = sadd.s32 1, %s1794
                  %p1800 = scmp.ge.s32.totalorder %s1799, %s1778
                  %s1801 = scalar_select %p1800, 0, %s1799
                  %s1802 = smul.u32 %s1801, 8
                  %s1803 = smul.u32 %s1801, 8
                  %s1804 = scalar_lea.vmem %s1782, %s1802 [#allocation4]
                  %s1805 = scalar_lea.vmem %s1785, %s1803
                $region87: #{velocity_model_nam.1} parent=74 // loop_footer
                  %s1791 = sadd.s32 %s1789, 1
                $region88: #{velocity_model_nam.1} parent=74 // loop_footer_branch
                  %1788 = sbr.rel target = $region84
                $region89: #{velocity_model_nam.1} parent=74 // loop_exit
                  _
              $region75: #{velocity_model_nam.1} parent=59 // pred_fallthru
                _
              %p1806 = pneg %p1625
              // Predicated region
              $region90: #{velocity_model_nam.1} parent=59 // pred_check
                _
              $region91: #{velocity_model_nam.1} parent=59 // pred_check_branch
                %1808 = sbr.rel (%p1625) target = $region93
              $region92: #{velocity_model_nam.1} parent=59 // pred_region
                %s1809 = sand.u32 %s1598, 7
                %s1810 = ssub.s32 %s1598, %s1809
                %s1811 = scalar_lea.vmem %s1591, %s1810 [#allocation4]
                %s1812 = ssub.s32 %s1598, %s1809
                %s1813 = scalar_lea.vmem %s1601, %s1812
                %s1814 = sshrl.u32 %s1598, 3
                %s1815 = sshrl.u32 %s1814, 6
                // While loop
                $region94: #{velocity_model_nam.1} parent=92 // loop_pre_header
                  _
                $region95: #{velocity_model_nam.1} parent=92 // loop_header
                  %s1819 = sphi 0, %s1821
                  %p1820 = scmp.ge.s32.totalorder %s1819, %s1815
                  %s1824 = sphi 0, %s1957
                  %s1825 = sphi %s1591, %s1960
                  %s1826 = sphi %s1601, %s1961
                $region96: #{velocity_model_nam.1} parent=92 // loop_header_branch
                  %1823 = sbr.rel (%p1820) target = $region100
                $region97: #{velocity_model_nam.1} parent=92 // loop_body
                  %v1827 = vld [vmem:[%s1825] sm:$0xff]
                  %1828 = vst [vmem:[%s1826] sm:$0xff] %v1827
                  %v1829 = vld [vmem:[%s1825 + $0x8] sm:$0xff]
                  %1830 = vst [vmem:[%s1826 + $0x8] sm:$0xff] %v1829
                  %v1831 = vld [vmem:[%s1825 + $0x10] sm:$0xff]
                  %1832 = vst [vmem:[%s1826 + $0x10] sm:$0xff] %v1831
                  %v1833 = vld [vmem:[%s1825 + $0x18] sm:$0xff]
                  %1834 = vst [vmem:[%s1826 + $0x18] sm:$0xff] %v1833
                  %v1835 = vld [vmem:[%s1825 + $0x20] sm:$0xff]
                  %1836 = vst [vmem:[%s1826 + $0x20] sm:$0xff] %v1835
                  %v1837 = vld [vmem:[%s1825 + $0x28] sm:$0xff]
                  %1838 = vst [vmem:[%s1826 + $0x28] sm:$0xff] %v1837
                  %v1839 = vld [vmem:[%s1825 + $0x30] sm:$0xff]
                  %1840 = vst [vmem:[%s1826 + $0x30] sm:$0xff] %v1839
                  %v1841 = vld [vmem:[%s1825 + $0x38] sm:$0xff]
                  %1842 = vst [vmem:[%s1826 + $0x38] sm:$0xff] %v1841
                  %v1843 = vld [vmem:[%s1825 + $0x40] sm:$0xff]
                  %1844 = vst [vmem:[%s1826 + $0x40] sm:$0xff] %v1843
                  %v1845 = vld [vmem:[%s1825 + $0x48] sm:$0xff]
                  %1846 = vst [vmem:[%s1826 + $0x48] sm:$0xff] %v1845
                  %v1847 = vld [vmem:[%s1825 + $0x50] sm:$0xff]
                  %1848 = vst [vmem:[%s1826 + $0x50] sm:$0xff] %v1847
                  %v1849 = vld [vmem:[%s1825 + $0x58] sm:$0xff]
                  %1850 = vst [vmem:[%s1826 + $0x58] sm:$0xff] %v1849
                  %v1851 = vld [vmem:[%s1825 + $0x60] sm:$0xff]
                  %1852 = vst [vmem:[%s1826 + $0x60] sm:$0xff] %v1851
                  %v1853 = vld [vmem:[%s1825 + $0x68] sm:$0xff]
                  %1854 = vst [vmem:[%s1826 + $0x68] sm:$0xff] %v1853
                  %v1855 = vld [vmem:[%s1825 + $0x70] sm:$0xff]
                  %1856 = vst [vmem:[%s1826 + $0x70] sm:$0xff] %v1855
                  %v1857 = vld [vmem:[%s1825 + $0x78] sm:$0xff]
                  %1858 = vst [vmem:[%s1826 + $0x78] sm:$0xff] %v1857
                  %v1859 = vld [vmem:[%s1825 + $0x80] sm:$0xff]
                  %1860 = vst [vmem:[%s1826 + $0x80] sm:$0xff] %v1859
                  %v1861 = vld [vmem:[%s1825 + $0x88] sm:$0xff]
                  %1862 = vst [vmem:[%s1826 + $0x88] sm:$0xff] %v1861
                  %v1863 = vld [vmem:[%s1825 + $0x90] sm:$0xff]
                  %1864 = vst [vmem:[%s1826 + $0x90] sm:$0xff] %v1863
                  %v1865 = vld [vmem:[%s1825 + $0x98] sm:$0xff]
                  %1866 = vst [vmem:[%s1826 + $0x98] sm:$0xff] %v1865
                  %v1867 = vld [vmem:[%s1825 + $0xa0] sm:$0xff]
                  %1868 = vst [vmem:[%s1826 + $0xa0] sm:$0xff] %v1867
                  %v1869 = vld [vmem:[%s1825 + $0xa8] sm:$0xff]
                  %1870 = vst [vmem:[%s1826 + $0xa8] sm:$0xff] %v1869
                  %v1871 = vld [vmem:[%s1825 + $0xb0] sm:$0xff]
                  %1872 = vst [vmem:[%s1826 + $0xb0] sm:$0xff] %v1871
                  %v1873 = vld [vmem:[%s1825 + $0xb8] sm:$0xff]
                  %1874 = vst [vmem:[%s1826 + $0xb8] sm:$0xff] %v1873
                  %v1875 = vld [vmem:[%s1825 + $0xc0] sm:$0xff]
                  %1876 = vst [vmem:[%s1826 + $0xc0] sm:$0xff] %v1875
                  %v1877 = vld [vmem:[%s1825 + $0xc8] sm:$0xff]
                  %1878 = vst [vmem:[%s1826 + $0xc8] sm:$0xff] %v1877
                  %v1879 = vld [vmem:[%s1825 + $0xd0] sm:$0xff]
                  %1880 = vst [vmem:[%s1826 + $0xd0] sm:$0xff] %v1879
                  %v1881 = vld [vmem:[%s1825 + $0xd8] sm:$0xff]
                  %1882 = vst [vmem:[%s1826 + $0xd8] sm:$0xff] %v1881
                  %v1883 = vld [vmem:[%s1825 + $0xe0] sm:$0xff]
                  %1884 = vst [vmem:[%s1826 + $0xe0] sm:$0xff] %v1883
                  %v1885 = vld [vmem:[%s1825 + $0xe8] sm:$0xff]
                  %1886 = vst [vmem:[%s1826 + $0xe8] sm:$0xff] %v1885
                  %v1887 = vld [vmem:[%s1825 + $0xf0] sm:$0xff]
                  %1888 = vst [vmem:[%s1826 + $0xf0] sm:$0xff] %v1887
                  %v1889 = vld [vmem:[%s1825 + $0xf8] sm:$0xff]
                  %1890 = vst [vmem:[%s1826 + $0xf8] sm:$0xff] %v1889
                  %v1891 = vld [vmem:[%s1825 + $0x100] sm:$0xff]
                  %1892 = vst [vmem:[%s1826 + $0x100] sm:$0xff] %v1891
                  %v1893 = vld [vmem:[%s1825 + $0x108] sm:$0xff]
                  %1894 = vst [vmem:[%s1826 + $0x108] sm:$0xff] %v1893
                  %v1895 = vld [vmem:[%s1825 + $0x110] sm:$0xff]
                  %1896 = vst [vmem:[%s1826 + $0x110] sm:$0xff] %v1895
                  %v1897 = vld [vmem:[%s1825 + $0x118] sm:$0xff]
                  %1898 = vst [vmem:[%s1826 + $0x118] sm:$0xff] %v1897
                  %v1899 = vld [vmem:[%s1825 + $0x120] sm:$0xff]
                  %1900 = vst [vmem:[%s1826 + $0x120] sm:$0xff] %v1899
                  %v1901 = vld [vmem:[%s1825 + $0x128] sm:$0xff]
                  %1902 = vst [vmem:[%s1826 + $0x128] sm:$0xff] %v1901
                  %v1903 = vld [vmem:[%s1825 + $0x130] sm:$0xff]
                  %1904 = vst [vmem:[%s1826 + $0x130] sm:$0xff] %v1903
                  %v1905 = vld [vmem:[%s1825 + $0x138] sm:$0xff]
                  %1906 = vst [vmem:[%s1826 + $0x138] sm:$0xff] %v1905
                  %v1907 = vld [vmem:[%s1825 + $0x140] sm:$0xff]
                  %1908 = vst [vmem:[%s1826 + $0x140] sm:$0xff] %v1907
                  %v1909 = vld [vmem:[%s1825 + $0x148] sm:$0xff]
                  %1910 = vst [vmem:[%s1826 + $0x148] sm:$0xff] %v1909
                  %v1911 = vld [vmem:[%s1825 + $0x150] sm:$0xff]
                  %1912 = vst [vmem:[%s1826 + $0x150] sm:$0xff] %v1911
                  %v1913 = vld [vmem:[%s1825 + $0x158] sm:$0xff]
                  %1914 = vst [vmem:[%s1826 + $0x158] sm:$0xff] %v1913
                  %v1915 = vld [vmem:[%s1825 + $0x160] sm:$0xff]
                  %1916 = vst [vmem:[%s1826 + $0x160] sm:$0xff] %v1915
                  %v1917 = vld [vmem:[%s1825 + $0x168] sm:$0xff]
                  %1918 = vst [vmem:[%s1826 + $0x168] sm:$0xff] %v1917
                  %v1919 = vld [vmem:[%s1825 + $0x170] sm:$0xff]
                  %1920 = vst [vmem:[%s1826 + $0x170] sm:$0xff] %v1919
                  %v1921 = vld [vmem:[%s1825 + $0x178] sm:$0xff]
                  %1922 = vst [vmem:[%s1826 + $0x178] sm:$0xff] %v1921
                  %v1923 = vld [vmem:[%s1825 + $0x180] sm:$0xff]
                  %1924 = vst [vmem:[%s1826 + $0x180] sm:$0xff] %v1923
                  %v1925 = vld [vmem:[%s1825 + $0x188] sm:$0xff]
                  %1926 = vst [vmem:[%s1826 + $0x188] sm:$0xff] %v1925
                  %v1927 = vld [vmem:[%s1825 + $0x190] sm:$0xff]
                  %1928 = vst [vmem:[%s1826 + $0x190] sm:$0xff] %v1927
                  %v1929 = vld [vmem:[%s1825 + $0x198] sm:$0xff]
                  %1930 = vst [vmem:[%s1826 + $0x198] sm:$0xff] %v1929
                  %v1931 = vld [vmem:[%s1825 + $0x1a0] sm:$0xff]
                  %1932 = vst [vmem:[%s1826 + $0x1a0] sm:$0xff] %v1931
                  %v1933 = vld [vmem:[%s1825 + $0x1a8] sm:$0xff]
                  %1934 = vst [vmem:[%s1826 + $0x1a8] sm:$0xff] %v1933
                  %v1935 = vld [vmem:[%s1825 + $0x1b0] sm:$0xff]
                  %1936 = vst [vmem:[%s1826 + $0x1b0] sm:$0xff] %v1935
                  %v1937 = vld [vmem:[%s1825 + $0x1b8] sm:$0xff]
                  %1938 = vst [vmem:[%s1826 + $0x1b8] sm:$0xff] %v1937
                  %v1939 = vld [vmem:[%s1825 + $0x1c0] sm:$0xff]
                  %1940 = vst [vmem:[%s1826 + $0x1c0] sm:$0xff] %v1939
                  %v1941 = vld [vmem:[%s1825 + $0x1c8] sm:$0xff]
                  %1942 = vst [vmem:[%s1826 + $0x1c8] sm:$0xff] %v1941
                  %v1943 = vld [vmem:[%s1825 + $0x1d0] sm:$0xff]
                  %1944 = vst [vmem:[%s1826 + $0x1d0] sm:$0xff] %v1943
                  %v1945 = vld [vmem:[%s1825 + $0x1d8] sm:$0xff]
                  %1946 = vst [vmem:[%s1826 + $0x1d8] sm:$0xff] %v1945
                  %v1947 = vld [vmem:[%s1825 + $0x1e0] sm:$0xff]
                  %1948 = vst [vmem:[%s1826 + $0x1e0] sm:$0xff] %v1947
                  %v1949 = vld [vmem:[%s1825 + $0x1e8] sm:$0xff]
                  %1950 = vst [vmem:[%s1826 + $0x1e8] sm:$0xff] %v1949
                  %v1951 = vld [vmem:[%s1825 + $0x1f0] sm:$0xff]
                  %1952 = vst [vmem:[%s1826 + $0x1f0] sm:$0xff] %v1951
                  %v1953 = vld [vmem:[%s1825 + $0x1f8] sm:$0xff]
                  %1954 = vst [vmem:[%s1826 + $0x1f8] sm:$0xff] %v1953
                  %s1955 = sadd.s32 1, %s1824
                  %p1956 = scmp.ge.s32.totalorder %s1955, %s1815
                  %s1957 = scalar_select %p1956, 0, %s1955
                  %s1958 = smul.u32 %s1957, 512
                  %s1959 = smul.u32 %s1957, 512
                  %s1960 = scalar_lea.vmem %s1591, %s1958 [#allocation4]
                  %s1961 = scalar_lea.vmem %s1601, %s1959
                $region98: #{velocity_model_nam.1} parent=92 // loop_footer
                  %s1821 = sadd.s32 %s1819, 1
                $region99: #{velocity_model_nam.1} parent=92 // loop_footer_branch
                  %1818 = sbr.rel target = $region95
                $region100: #{velocity_model_nam.1} parent=92 // loop_exit
                  _
                %s1962 = sshrl.u32 %s1814, 6
                %s1963 = sand.u32 %s1814, 63
                %s1964 = smul.u32 %s1962, 64
                %s1965 = smul.u32 128, %s1964
                %s1966 = sshra.s32 %s1965, 4
                %s1967 = scalar_lea.vmem %s1591, %s1966 [#allocation4]
                %s1968 = smul.u32 128, %s1964
                %s1969 = sshra.s32 %s1968, 4
                %s1970 = scalar_lea.vmem %s1601, %s1969
                // While loop
                $region101: #{velocity_model_nam.1} parent=92 // loop_pre_header
                  _
                $region102: #{velocity_model_nam.1} parent=92 // loop_header
                  %s1974 = sphi 0, %s1976
                  %p1975 = scmp.ge.s32.totalorder %s1974, %s1963
                  %s1979 = sphi 0, %s1986
                  %s1980 = sphi %s1967, %s1989
                  %s1981 = sphi %s1970, %s1990
                $region103: #{velocity_model_nam.1} parent=92 // loop_header_branch
                  %1978 = sbr.rel (%p1975) target = $region107
                $region104: #{velocity_model_nam.1} parent=92 // loop_body
                  %v1982 = vld [vmem:[%s1980] sm:$0xff]
                  %1983 = vst [vmem:[%s1981] sm:$0xff] %v1982
                  %s1984 = sadd.s32 1, %s1979
                  %p1985 = scmp.ge.s32.totalorder %s1984, %s1963
                  %s1986 = scalar_select %p1985, 0, %s1984
                  %s1987 = smul.u32 %s1986, 8
                  %s1988 = smul.u32 %s1986, 8
                  %s1989 = scalar_lea.vmem %s1967, %s1987 [#allocation4]
                  %s1990 = scalar_lea.vmem %s1970, %s1988
                $region105: #{velocity_model_nam.1} parent=92 // loop_footer
                  %s1976 = sadd.s32 %s1974, 1
                $region106: #{velocity_model_nam.1} parent=92 // loop_footer_branch
                  %1973 = sbr.rel target = $region102
                $region107: #{velocity_model_nam.1} parent=92 // loop_exit
                  _
                %s1991 = sshll.u32 1, %s1809
                %s1992 = ssub.s32 %s1991, 1
                loop: start=0, step=1, limit=1
                $region108: #{velocity_model_nam.1} parent=92 // loop_pre_header
                  _
                $region109: #{velocity_model_nam.1} parent=92 // loop_header
                  %s1994 = sphi 0, %s1998
                  %p1995 = scmp.ge.s32.totalorder %s1994, 1
                  %s1999 = sphi %s1811, %s1811
                  %s2000 = sphi %s1813, %s1813
                $region110: #{velocity_model_nam.1} parent=92 // loop_header_branch
                  %1997 = sbr.rel (%p1995) target = $region114
                $region111: #{velocity_model_nam.1} parent=92 // loop_body
                  %v2001 = vld [vmem:[%s1999] sm:%s1992]
                  %2002 = vst [vmem:[%s2000] sm:%s1992] %v2001
                $region112: #{velocity_model_nam.1} parent=92 // loop_footer
                  %s1998 = sadd.s32 1, %s1994
                $region113: #{velocity_model_nam.1} parent=92 // loop_footer_branch
                  %1993 = sbr.rel target = $region109
                $region114: #{velocity_model_nam.1} parent=92 // loop_exit
                  _
              $region93: #{velocity_model_nam.1} parent=59 // pred_fallthru
                _
            $region60: #{velocity_model_nam.1} parent=55 // pred_fallthru
              _
            // Predicated region
            $region61: #{velocity_model_nam.1} parent=55 // pred_check
              %p1609 = pneg %p1605
            $region62: #{velocity_model_nam.1} parent=55 // pred_check_branch
              %1611 = sbr.rel (%p1609) target = $region64
            $region63: #{velocity_model_nam.1} parent=55 // pred_region
              %s1612 = sshll.u32 1, %s1598
              %s1613 = ssub.s32 %s1612, 1
              loop: start=0, step=1, limit=1
              $region65: #{velocity_model_nam.1} parent=63 // loop_pre_header
                _
              $region66: #{velocity_model_nam.1} parent=63 // loop_header
                %s1615 = sphi 0, %s1619
                %p1616 = scmp.ge.s32.totalorder %s1615, 1
                %s1620 = sphi %s1591, %s1591
                %s1621 = sphi %s1601, %s1601
              $region67: #{velocity_model_nam.1} parent=63 // loop_header_branch
                %1618 = sbr.rel (%p1616) target = $region71
              $region68: #{velocity_model_nam.1} parent=63 // loop_body
                %v1622 = vld [vmem:[%s1620] sm:%s1613]
                %1623 = vst [vmem:[%s1621] sm:%s1613] %v1622
              $region69: #{velocity_model_nam.1} parent=63 // loop_footer
                %s1619 = sadd.s32 1, %s1615
              $region70: #{velocity_model_nam.1} parent=63 // loop_footer_branch
                %1614 = sbr.rel target = $region66
              $region71: #{velocity_model_nam.1} parent=63 // loop_exit
                _
            $region64: #{velocity_model_nam.1} parent=55 // pred_fallthru
              _
          $region56: #{velocity_model_nam.1} parent=51 // pred_fallthru
            _
          %2003 = vnop
        $region52: #{velocity_model_nam.1} parent=43 // pred_fallthru
          _
      $region44: #{velocity_model_nam.1} parent=5 // pred_fallthru
        _
      %p2004 = scmp.le.s32.totalorder 2, %s13
      // Predicated region
      $region115: #{velocity_model_nam.1} parent=5 // pred_check
        %p2005 = pneg %p2004
      $region116: #{velocity_model_nam.1} parent=5 // pred_check_branch
        %2007 = sbr.rel (%p2005) target = $region118
      $region117: #{velocity_model_nam.1} parent=5 // pred_region
        %s2008 = ssub.s32 %s13, 2
        // Predicated region
        $region119: #{velocity_model_nam.1} parent=117 // pred_check
          %p2009 = pneg %p178
        $region120: #{velocity_model_nam.1} parent=117 // pred_check_branch
          %2011 = sbr.rel (%p2009) target = $region122
        $region121: #{velocity_model_nam.1} parent=117 // pred_region
          %s2012 = sand.u32 %s163, 1
          %s2013 = sand.u32 %s163, 1
          %s2014 = smul.addr %s2013, 2
          %s2015 = scalar_lea.vmem [#allocation4], %s2014
        $region122: #{velocity_model_nam.1} parent=117 // pred_fallthru
          _
      $region118: #{velocity_model_nam.1} parent=5 // pred_fallthru
        _
    $region6: #{velocity_model_nam.1} parent=1 // loop_footer
      %s17 = sadd.s32 1, %s13
    $region7: #{velocity_model_nam.1} parent=1 // loop_footer_branch
      %12 = sbr.rel target = $region3
    $region8: #{velocity_model_nam.1} parent=1 // loop_exit
      _
    %2016 = vsyncpa [#allocation3], 1
    %s2017 = scalar_lea.sflag [#allocation3], 1
    %2018 = vsyncpa %s2017, 1

</llo_original>
